<compile_context>
chip_gen: v7x
topology: tpu7x:2x2x1
jax: 0.10.0
libtpu: 0.0.40
codegen_flags: <defaults>
</compile_context>

<pallas_src>
import functools

import jax
import jax.numpy as jnp
from jax.experimental import pallas as pl
from jax.experimental.pallas import tpu as pltpu

CPAD = 128            # lane-dense classifier width (true n_classes = 2)
NEG_BIG = -1e30       # finite max-pool init (lens >= 1 guarantees overwrite)


def rnn_aucm_kernel(x_ref, lens_ref, wih_ref, whh_ref, bh_ref, wfc_ref, bfc_ref,
                    sign_ref, labels_ref, scal_ref,
                    logits_ref, loss_ref):
    """Fused RNN encoder + max-pool + linear head + AUCM loss.

    x_ref:      (T, B, D)     f32  padded GloVe embeddings (seq-first)
    lens_ref:   (B, 1)        i32  valid sequence lengths (>= 1)
    wih_ref:    (D, H)        f32  input->hidden weights
    whh_ref:    (H, H)        f32  hidden->hidden weights
    bh_ref:     (1, H)        f32  hidden bias
    wfc_ref:    (H, CPAD)     f32  classifier weights (cols >= 2 are zero)
    bfc_ref:    (1, CPAD)     f32  classifier bias   (cols >= 2 are zero)
    sign_ref:   (1, CPAD)     f32  [-1, +1, 0, ...] logit-difference mask
    labels_ref: (B, 1)        i32  binary labels {0,1}
    scal_ref:   (3,) SMEM     f32  [a, b, alpha] AUCM scalars
    logits_ref: (B, CPAD)     f32  output logits (lane-dense; cols >= 2 unused)
    loss_ref:   (1, 1)        f32  output AUCM loss
    """
    T, B, D = x_ref.shape
    H = whh_ref.shape[0]

    lens = lens_ref[...]                                   # (B, 1) int32

    # ---- hoisted input projection: one big matmul, bf16 operands / f32 acc ----
    x_all = x_ref[...].reshape(T * B, D).astype(jnp.bfloat16)
    wih_bf = wih_ref[...].astype(jnp.bfloat16)
    p_all = jnp.dot(x_all, wih_bf,
                    preferred_element_type=jnp.float32).reshape(T, B, H)
    p_all = p_all + bh_ref[...]                            # bias added once

    whh_bf = whh_ref[...].astype(jnp.bfloat16)             # hoisted out of loop

    # ---- recurrence: fully unrolled (T small/static), two independent
    #      batch halves interleaved so MXU / EUP work overlaps across halves.
    n_halves = 2 if (B % 16 == 0 and B >= 16) else 1
    bounds = [(i * (B // n_halves), (i + 1) * (B // n_halves))
              for i in range(n_halves)]
    p_parts = [p_all[:, lo:hi, :] for lo, hi in bounds]
    lens_parts = [lens[lo:hi] for lo, hi in bounds]
    hs = [jnp.zeros((hi - lo, H), jnp.float32) for lo, hi in bounds]
    pools = [jnp.full((hi - lo, H), NEG_BIG, jnp.float32) for lo, hi in bounds]

    for t in range(T):
        # NOTE: carry is NOT masked — valid only because collate_pad_ pads at
        # the END of each sequence; masked steps never reach the pool.
        zs = [p_parts[i][t]
              + jnp.dot(hs[i].astype(jnp.bfloat16), whh_bf,
                        preferred_element_type=jnp.float32)
              for i in range(n_halves)]
        hs = [jnp.tanh(z) for z in zs]
        pools = [jnp.where(lens_parts[i] > t,
                           jnp.maximum(pools[i], hs[i]),
                           pools[i])
                 for i in range(n_halves)]

    pool = pools[0] if n_halves == 1 else jnp.concatenate(pools, axis=0)

    # ---- classifier head (lane-dense output) ----
    logits = (jnp.dot(pool.astype(jnp.bfloat16),
                      wfc_ref[...].astype(jnp.bfloat16),
                      preferred_element_type=jnp.float32)
              + bfc_ref[...])                              # (B, CPAD)
    logits_ref[...] = logits

    # ---- AUCM loss on softmax positive-class probability ----
    # softmax(l)[1] over the 2 real classes == sigmoid(l1 - l0)
    #                                       == 0.5*(tanh(0.5*(l1-l0)) + 1).
    d = jnp.sum(logits * sign_ref[...], axis=1, keepdims=True)   # (B, 1) = l1-l0
    pred = 0.5 * (jnp.tanh(0.5 * d) + 1.0)                        # exact sigmoid

    a = scal_ref[0]
    b = scal_ref[1]
    alpha = scal_ref[2]

    y = labels_ref[...].astype(jnp.float32)                # (B, 1)
    pos = (y == 1.0).astype(jnp.float32)
    neg = 1.0 - pos
    # NOTE: if the batch is ever padded, pos/neg must exclude padded rows and
    # the means be renormalized by the true batch size.
    p = jnp.mean(pos)                                      # imratio from the batch
    margin = 1.0

    loss = ((1.0 - p) * jnp.mean((pred - a) ** 2 * pos)
            + p * jnp.mean((pred - b) ** 2 * neg)
            + 2.0 * alpha * (p * (1.0 - p) * margin
                             + jnp.mean(p * pred * neg - (1.0 - p) * pred * pos))
            - p * (1.0 - p) * alpha ** 2)
    loss_ref[...] = jnp.reshape(loss, (1, 1))


@jax.jit
def rnn_aucm_forward(x, lens, wih, whh, bh, wfc, bfc, labels, aucm_scalars):
    T, B, D = x.shape
    H = whh.shape[0]
    C = wfc.shape[1]

    # collate_pad_ guarantees lens >= 1; clamp defensively so the NEG_BIG pool
    # init can never leak into the logits.
    lens = jnp.maximum(lens, 1)

    # Lane-dense classifier: zero-pad the head to CPAD columns.
    wfc_pad = jnp.zeros((H, CPAD), jnp.float32).at[:, :C].set(wfc)
    bfc_pad = jnp.zeros((1, CPAD), jnp.float32).at[:, :C].set(bfc)
    # Precomputed logit-difference mask: d = sum(logits * sign) = l1 - l0.
    sign = jnp.zeros((1, CPAD), jnp.float32).at[0, 0].set(-1.0).at[0, 1].set(1.0)

    vmem = pl.BlockSpec(memory_space=pltpu.MemorySpace.VMEM)
    smem = pl.BlockSpec(memory_space=pltpu.MemorySpace.SMEM)

    flops = 2 * T * B * D * H + 2 * T * B * H * H + 2 * B * H * CPAD
    transcendentals = T * B * H + B
    bytes_accessed = 4 * (T * B * D + D * H + H * H + H + H * CPAD + CPAD
                          + CPAD + 2 * B + 3 + B * CPAD + 1)

    logits_wide, loss = pl.pallas_call(
        rnn_aucm_kernel,
        out_shape=(jax.ShapeDtypeStruct((B, CPAD), jnp.float32),
                   jax.ShapeDtypeStruct((1, 1), jnp.float32)),
        in_specs=[vmem, vmem, vmem, vmem, vmem, vmem, vmem, vmem, vmem, smem],
        out_specs=(vmem, vmem),
        compiler_params=pltpu.CompilerParams(
            vmem_limit_bytes=int(min(64 * 2**20,
                                     max(32 * 2**20, 4 * bytes_accessed)))),
        cost_estimate=pl.CostEstimate(flops=flops,
                                      transcendentals=transcendentals,
                                      bytes_accessed=bytes_accessed),
    )(x, lens, wih, whh, bh, wfc_pad, bfc_pad, sign, labels, aucm_scalars)
    return logits_wide[:, :C], loss


def ref_forward(x, lens, wih, whh, bh, wfc, bfc, labels, scal):
    """Pure-JAX reference mirroring the kernel's mixed-precision math."""
    T, B, D = x.shape
    H = whh.shape[0]
    lens = jnp.maximum(lens, 1)
    p_all = (jnp.dot(x.reshape(T * B, D).astype(jnp.bfloat16),
                     wih.astype(jnp.bfloat16),
                     preferred_element_type=jnp.float32).reshape(T, B, H) + bh)
    whh_bf = whh.astype(jnp.bfloat16)
    h = jnp.zeros((B, H), jnp.float32)
    pool = jnp.full((B, H), NEG_BIG, jnp.float32)
    for t in range(T):
        h = jnp.tanh(p_all[t] + jnp.dot(h.astype(jnp.bfloat16), whh_bf,
                                        preferred_element_type=jnp.float32))
        valid = lens > t
        pool = jnp.where(valid, jnp.maximum(pool, h), pool)
    logits = (jnp.dot(pool.astype(jnp.bfloat16), wfc.astype(jnp.bfloat16),
                      preferred_element_type=jnp.float32) + bfc)
    a, b, alpha = scal[0], scal[1], scal[2]
    probs = jax.nn.softmax(logits, axis=1)
    pred = probs[:, 1:2]
    y = labels.astype(jnp.float32)
    pos = (y == 1.0).astype(jnp.float32)
    neg = 1.0 - pos
    p = jnp.mean(pos)
    loss = ((1.0 - p) * jnp.mean((pred - a) ** 2 * pos)
            + p * jnp.mean((pred - b) ** 2 * neg)
            + 2.0 * alpha * (p * (1.0 - p) * 1.0
                             + jnp.mean(p * pred * neg - (1.0 - p) * pred * pos))
            - p * (1.0 - p) * alpha ** 2)
    return logits, loss.reshape(1, 1)


if __name__ == "__main__":
    # Small shapes consistent with the module:
    #   word_embed_dim (GLOVE_DIM=300 -> scaled to 128), encoder_dim=128,
    #   n_enc_layers=1, n_classes=2, pool_type='max', linear_fc=True.
    # B=16 so the two-half interleaved recurrence path (B % 16 == 0) is used.
    T, B, D, H, C = 8, 16, 128, 128, 2

    key = jax.random.PRNGKey(0)
    kx, kl, k1, k2, k3, k4, k5, ky = jax.random.split(key, 8)

    x = jax.random.normal(kx, (T, B, D), dtype=jnp.float32)           # (T, B, D)
    lens = jax.random.randint(kl, (B, 1), 1, T + 1, dtype=jnp.int32)  # valid lengths
    wih = 0.1 * jax.random.normal(k1, (D, H), dtype=jnp.float32)
    whh = 0.1 * jax.random.normal(k2, (H, H), dtype=jnp.float32)
    bh = 0.1 * jax.random.normal(k3, (1, H), dtype=jnp.float32)
    wfc = 0.1 * jax.random.normal(k4, (H, C), dtype=jnp.float32)
    bfc = 0.1 * jax.random.normal(k5, (1, C), dtype=jnp.float32)
    labels = jax.random.randint(ky, (B, 1), 0, 2, dtype=jnp.int32)
    # AUCM scalars a, b, alpha are zero-initialized in Learner.__init__;
    # use small nonzero values so all loss terms are exercised.
    aucm_scalars = jnp.array([0.1, -0.2, 0.3], dtype=jnp.float32)

    logits, loss = rnn_aucm_forward(x, lens, wih, whh, bh, wfc, bfc,
                                    labels, aucm_scalars)
    jax.block_until_ready((logits, loss))

    ref_logits, ref_loss = ref_forward(x, lens, wih, whh, bh, wfc, bfc,
                                       labels, aucm_scalars)
    # logits: same bf16-operand / f32-accumulate math in kernel and reference.
    assert jnp.allclose(logits, ref_logits, atol=1e-3, rtol=1e-3), (
        jnp.max(jnp.abs(logits - ref_logits)))
    # loss: exact tanh-form sigmoid in kernel vs softmax in reference.
    assert jnp.allclose(loss, ref_loss, atol=1e-3, rtol=1e-3), (
        jnp.max(jnp.abs(loss - ref_loss)))

    print("KERNEL_OK")
</pallas_src>

<mosaic_0001>
module attributes {stable_mosaic.version = 11 : i64} {
  func.func @rnn_aucm_kernel(%arg0: memref<8x16x128xf32, #tpu.memory_space<vmem>>, %arg1: memref<16x1xi32, #tpu.memory_space<vmem>>, %arg2: memref<128x128xf32, #tpu.memory_space<vmem>>, %arg3: memref<128x128xf32, #tpu.memory_space<vmem>>, %arg4: memref<1x128xf32, #tpu.memory_space<vmem>>, %arg5: memref<128x128xf32, #tpu.memory_space<vmem>>, %arg6: memref<1x128xf32, #tpu.memory_space<vmem>>, %arg7: memref<1x128xf32, #tpu.memory_space<vmem>>, %arg8: memref<16x1xi32, #tpu.memory_space<vmem>>, %arg9: memref<3xf32, #tpu.memory_space<smem>>, %arg10: memref<16x128xf32, #tpu.memory_space<vmem>>, %arg11: memref<1x1xf32, #tpu.memory_space<vmem>>) attributes {dimension_semantics = [], scalar_prefetch = 0 : i64, scratch_operands = 0 : i64, tpu.core_type = #tpu.core_type<tc>} {
    %c0 = arith.constant 0 : index
    %c0_0 = arith.constant 0 : index
    %0 = vector.load %arg1[%c0, %c0_0] : memref<16x1xi32, #tpu.memory_space<vmem>>, vector<16x1xi32>
    %c0_1 = arith.constant 0 : index
    %c0_2 = arith.constant 0 : index
    %c0_3 = arith.constant 0 : index
    %1 = vector.load %arg0[%c0_1, %c0_2, %c0_3] : memref<8x16x128xf32, #tpu.memory_space<vmem>>, vector<8x16x128xf32>
    %2 = vector.shape_cast %1 : vector<8x16x128xf32> to vector<128x128xf32>
    %3 = arith.truncf %2 : vector<128x128xf32> to vector<128x128xbf16>
    %c0_4 = arith.constant 0 : index
    %c0_5 = arith.constant 0 : index
    %4 = vector.load %arg2[%c0_4, %c0_5] : memref<128x128xf32, #tpu.memory_space<vmem>>, vector<128x128xf32>
    %5 = arith.truncf %4 : vector<128x128xf32> to vector<128x128xbf16>
    %cst = arith.constant dense<0.000000e+00> : vector<128x128xf32>
    %6 = tpu.matmul %3, %5, %cst {dimension_numbers = #tpu.dot_dimension_numbers<[1], [0], [0], [1], [0, 0, 1, 1], [], []>} : vector<128x128xbf16>, vector<128x128xbf16>, vector<128x128xf32> -> vector<128x128xf32>
    %7 = vector.shape_cast %6 : vector<128x128xf32> to vector<8x16x128xf32>
    %c0_6 = arith.constant 0 : index
    %c0_7 = arith.constant 0 : index
    %8 = vector.load %arg4[%c0_6, %c0_7] : memref<1x128xf32, #tpu.memory_space<vmem>>, vector<1x128xf32>
    %9 = vector.shape_cast %8 : vector<1x128xf32> to vector<1x1x128xf32>
    %10 = vector.broadcast %9 : vector<1x1x128xf32> to vector<8x16x128xf32>
    %11 = arith.addf %7, %10 : vector<8x16x128xf32>
    %c0_8 = arith.constant 0 : index
    %c0_9 = arith.constant 0 : index
    %12 = vector.load %arg3[%c0_8, %c0_9] : memref<128x128xf32, #tpu.memory_space<vmem>>, vector<128x128xf32>
    %13 = arith.truncf %12 : vector<128x128xf32> to vector<128x128xbf16>
    %14 = vector.extract_strided_slice %11 {offsets = [0, 0, 0], sizes = [8, 8, 128], strides = [1, 1, 1]} : vector<8x16x128xf32> to vector<8x8x128xf32>
    %15 = vector.extract_strided_slice %11 {offsets = [0, 8, 0], sizes = [8, 8, 128], strides = [1, 1, 1]} : vector<8x16x128xf32> to vector<8x8x128xf32>
    %16 = vector.extract_strided_slice %0 {offsets = [0, 0], sizes = [8, 1], strides = [1, 1]} : vector<16x1xi32> to vector<8x1xi32>
    %17 = vector.extract_strided_slice %0 {offsets = [8, 0], sizes = [8, 1], strides = [1, 1]} : vector<16x1xi32> to vector<8x1xi32>
    %cst_10 = arith.constant 0.000000e+00 : f32
    %18 = vector.broadcast %cst_10 : f32 to vector<8x128xf32>
    %cst_11 = arith.constant 0.000000e+00 : f32
    %19 = vector.broadcast %cst_11 : f32 to vector<8x128xf32>
    %cst_12 = arith.constant -1.000000e+30 : f32
    %20 = vector.broadcast %cst_12 : f32 to vector<8x128xf32>
    %cst_13 = arith.constant -1.000000e+30 : f32
    %21 = vector.broadcast %cst_13 : f32 to vector<8x128xf32>
    %22 = vector.extract_strided_slice %14 {offsets = [0, 0, 0], sizes = [1, 8, 128], strides = [1, 1, 1]} : vector<8x8x128xf32> to vector<1x8x128xf32>
    %23 = vector.shape_cast %22 : vector<1x8x128xf32> to vector<8x128xf32>
    %24 = arith.truncf %18 : vector<8x128xf32> to vector<8x128xbf16>
    %cst_14 = arith.constant dense<0.000000e+00> : vector<8x128xf32>
    %25 = tpu.matmul %24, %13, %cst_14 {dimension_numbers = #tpu.dot_dimension_numbers<[1], [0], [0], [1], [0, 0, 1, 1], [], []>} : vector<8x128xbf16>, vector<128x128xbf16>, vector<8x128xf32> -> vector<8x128xf32>
    %26 = arith.addf %23, %25 : vector<8x128xf32>
    %27 = vector.extract_strided_slice %15 {offsets = [0, 0, 0], sizes = [1, 8, 128], strides = [1, 1, 1]} : vector<8x8x128xf32> to vector<1x8x128xf32>
    %28 = vector.shape_cast %27 : vector<1x8x128xf32> to vector<8x128xf32>
    %29 = arith.truncf %19 : vector<8x128xf32> to vector<8x128xbf16>
    %cst_15 = arith.constant dense<0.000000e+00> : vector<8x128xf32>
    %30 = tpu.matmul %29, %13, %cst_15 {dimension_numbers = #tpu.dot_dimension_numbers<[1], [0], [0], [1], [0, 0, 1, 1], [], []>} : vector<8x128xbf16>, vector<128x128xbf16>, vector<8x128xf32> -> vector<8x128xf32>
    %31 = arith.addf %28, %30 : vector<8x128xf32>
    %32 = math.tanh %26 : vector<8x128xf32>
    %33 = math.tanh %31 : vector<8x128xf32>
    %c0_i32 = arith.constant 0 : i32
    %34 = vector.broadcast %c0_i32 : i32 to vector<8x1xi32>
    %35 = arith.cmpi sgt, %16, %34 : vector<8x1xi32>
    %36 = arith.maximumf %20, %32 : vector<8x128xf32>
    %37 = vector.shape_cast %35 : vector<8x1xi1> to vector<8x1xi1>
    %38 = vector.broadcast %37 : vector<8x1xi1> to vector<8x128xi1>
    %39 = arith.select %38, %36, %20 : vector<8x128xi1>, vector<8x128xf32>
    %c0_i32_16 = arith.constant 0 : i32
    %40 = vector.broadcast %c0_i32_16 : i32 to vector<8x1xi32>
    %41 = arith.cmpi sgt, %17, %40 : vector<8x1xi32>
    %42 = arith.maximumf %21, %33 : vector<8x128xf32>
    %43 = vector.shape_cast %41 : vector<8x1xi1> to vector<8x1xi1>
    %44 = vector.broadcast %43 : vector<8x1xi1> to vector<8x128xi1>
    %45 = arith.select %44, %42, %21 : vector<8x128xi1>, vector<8x128xf32>
    %46 = vector.extract_strided_slice %14 {offsets = [1, 0, 0], sizes = [1, 8, 128], strides = [1, 1, 1]} : vector<8x8x128xf32> to vector<1x8x128xf32>
    %47 = vector.shape_cast %46 : vector<1x8x128xf32> to vector<8x128xf32>
    %48 = arith.truncf %32 : vector<8x128xf32> to vector<8x128xbf16>
    %cst_17 = arith.constant dense<0.000000e+00> : vector<8x128xf32>
    %49 = tpu.matmul %48, %13, %cst_17 {dimension_numbers = #tpu.dot_dimension_numbers<[1], [0], [0], [1], [0, 0, 1, 1], [], []>} : vector<8x128xbf16>, vector<128x128xbf16>, vector<8x128xf32> -> vector<8x128xf32>
    %50 = arith.addf %47, %49 : vector<8x128xf32>
    %51 = vector.extract_strided_slice %15 {offsets = [1, 0, 0], sizes = [1, 8, 128], strides = [1, 1, 1]} : vector<8x8x128xf32> to vector<1x8x128xf32>
    %52 = vector.shape_cast %51 : vector<1x8x128xf32> to vector<8x128xf32>
    %53 = arith.truncf %33 : vector<8x128xf32> to vector<8x128xbf16>
    %cst_18 = arith.constant dense<0.000000e+00> : vector<8x128xf32>
    %54 = tpu.matmul %53, %13, %cst_18 {dimension_numbers = #tpu.dot_dimension_numbers<[1], [0], [0], [1], [0, 0, 1, 1], [], []>} : vector<8x128xbf16>, vector<128x128xbf16>, vector<8x128xf32> -> vector<8x128xf32>
    %55 = arith.addf %52, %54 : vector<8x128xf32>
    %56 = math.tanh %50 : vector<8x128xf32>
    %57 = math.tanh %55 : vector<8x128xf32>
    %c1_i32 = arith.constant 1 : i32
    %58 = vector.broadcast %c1_i32 : i32 to vector<8x1xi32>
    %59 = arith.cmpi sgt, %16, %58 : vector<8x1xi32>
    %60 = arith.maximumf %39, %56 : vector<8x128xf32>
    %61 = vector.shape_cast %59 : vector<8x1xi1> to vector<8x1xi1>
    %62 = vector.broadcast %61 : vector<8x1xi1> to vector<8x128xi1>
    %63 = arith.select %62, %60, %39 : vector<8x128xi1>, vector<8x128xf32>
    %c1_i32_19 = arith.constant 1 : i32
    %64 = vector.broadcast %c1_i32_19 : i32 to vector<8x1xi32>
    %65 = arith.cmpi sgt, %17, %64 : vector<8x1xi32>
    %66 = arith.maximumf %45, %57 : vector<8x128xf32>
    %67 = vector.shape_cast %65 : vector<8x1xi1> to vector<8x1xi1>
    %68 = vector.broadcast %67 : vector<8x1xi1> to vector<8x128xi1>
    %69 = arith.select %68, %66, %45 : vector<8x128xi1>, vector<8x128xf32>
    %70 = vector.extract_strided_slice %14 {offsets = [2, 0, 0], sizes = [1, 8, 128], strides = [1, 1, 1]} : vector<8x8x128xf32> to vector<1x8x128xf32>
    %71 = vector.shape_cast %70 : vector<1x8x128xf32> to vector<8x128xf32>
    %72 = arith.truncf %56 : vector<8x128xf32> to vector<8x128xbf16>
    %cst_20 = arith.constant dense<0.000000e+00> : vector<8x128xf32>
    %73 = tpu.matmul %72, %13, %cst_20 {dimension_numbers = #tpu.dot_dimension_numbers<[1], [0], [0], [1], [0, 0, 1, 1], [], []>} : vector<8x128xbf16>, vector<128x128xbf16>, vector<8x128xf32> -> vector<8x128xf32>
    %74 = arith.addf %71, %73 : vector<8x128xf32>
    %75 = vector.extract_strided_slice %15 {offsets = [2, 0, 0], sizes = [1, 8, 128], strides = [1, 1, 1]} : vector<8x8x128xf32> to vector<1x8x128xf32>
    %76 = vector.shape_cast %75 : vector<1x8x128xf32> to vector<8x128xf32>
    %77 = arith.truncf %57 : vector<8x128xf32> to vector<8x128xbf16>
    %cst_21 = arith.constant dense<0.000000e+00> : vector<8x128xf32>
    %78 = tpu.matmul %77, %13, %cst_21 {dimension_numbers = #tpu.dot_dimension_numbers<[1], [0], [0], [1], [0, 0, 1, 1], [], []>} : vector<8x128xbf16>, vector<128x128xbf16>, vector<8x128xf32> -> vector<8x128xf32>
    %79 = arith.addf %76, %78 : vector<8x128xf32>
    %80 = math.tanh %74 : vector<8x128xf32>
    %81 = math.tanh %79 : vector<8x128xf32>
    %c2_i32 = arith.constant 2 : i32
    %82 = vector.broadcast %c2_i32 : i32 to vector<8x1xi32>
    %83 = arith.cmpi sgt, %16, %82 : vector<8x1xi32>
    %84 = arith.maximumf %63, %80 : vector<8x128xf32>
    %85 = vector.shape_cast %83 : vector<8x1xi1> to vector<8x1xi1>
    %86 = vector.broadcast %85 : vector<8x1xi1> to vector<8x128xi1>
    %87 = arith.select %86, %84, %63 : vector<8x128xi1>, vector<8x128xf32>
    %c2_i32_22 = arith.constant 2 : i32
    %88 = vector.broadcast %c2_i32_22 : i32 to vector<8x1xi32>
    %89 = arith.cmpi sgt, %17, %88 : vector<8x1xi32>
    %90 = arith.maximumf %69, %81 : vector<8x128xf32>
    %91 = vector.shape_cast %89 : vector<8x1xi1> to vector<8x1xi1>
    %92 = vector.broadcast %91 : vector<8x1xi1> to vector<8x128xi1>
    %93 = arith.select %92, %90, %69 : vector<8x128xi1>, vector<8x128xf32>
    %94 = vector.extract_strided_slice %14 {offsets = [3, 0, 0], sizes = [1, 8, 128], strides = [1, 1, 1]} : vector<8x8x128xf32> to vector<1x8x128xf32>
    %95 = vector.shape_cast %94 : vector<1x8x128xf32> to vector<8x128xf32>
    %96 = arith.truncf %80 : vector<8x128xf32> to vector<8x128xbf16>
    %cst_23 = arith.constant dense<0.000000e+00> : vector<8x128xf32>
    %97 = tpu.matmul %96, %13, %cst_23 {dimension_numbers = #tpu.dot_dimension_numbers<[1], [0], [0], [1], [0, 0, 1, 1], [], []>} : vector<8x128xbf16>, vector<128x128xbf16>, vector<8x128xf32> -> vector<8x128xf32>
    %98 = arith.addf %95, %97 : vector<8x128xf32>
    %99 = vector.extract_strided_slice %15 {offsets = [3, 0, 0], sizes = [1, 8, 128], strides = [1, 1, 1]} : vector<8x8x128xf32> to vector<1x8x128xf32>
    %100 = vector.shape_cast %99 : vector<1x8x128xf32> to vector<8x128xf32>
    %101 = arith.truncf %81 : vector<8x128xf32> to vector<8x128xbf16>
    %cst_24 = arith.constant dense<0.000000e+00> : vector<8x128xf32>
    %102 = tpu.matmul %101, %13, %cst_24 {dimension_numbers = #tpu.dot_dimension_numbers<[1], [0], [0], [1], [0, 0, 1, 1], [], []>} : vector<8x128xbf16>, vector<128x128xbf16>, vector<8x128xf32> -> vector<8x128xf32>
    %103 = arith.addf %100, %102 : vector<8x128xf32>
    %104 = math.tanh %98 : vector<8x128xf32>
    %105 = math.tanh %103 : vector<8x128xf32>
    %c3_i32 = arith.constant 3 : i32
    %106 = vector.broadcast %c3_i32 : i32 to vector<8x1xi32>
    %107 = arith.cmpi sgt, %16, %106 : vector<8x1xi32>
    %108 = arith.maximumf %87, %104 : vector<8x128xf32>
    %109 = vector.shape_cast %107 : vector<8x1xi1> to vector<8x1xi1>
    %110 = vector.broadcast %109 : vector<8x1xi1> to vector<8x128xi1>
    %111 = arith.select %110, %108, %87 : vector<8x128xi1>, vector<8x128xf32>
    %c3_i32_25 = arith.constant 3 : i32
    %112 = vector.broadcast %c3_i32_25 : i32 to vector<8x1xi32>
    %113 = arith.cmpi sgt, %17, %112 : vector<8x1xi32>
    %114 = arith.maximumf %93, %105 : vector<8x128xf32>
    %115 = vector.shape_cast %113 : vector<8x1xi1> to vector<8x1xi1>
    %116 = vector.broadcast %115 : vector<8x1xi1> to vector<8x128xi1>
    %117 = arith.select %116, %114, %93 : vector<8x128xi1>, vector<8x128xf32>
    %118 = vector.extract_strided_slice %14 {offsets = [4, 0, 0], sizes = [1, 8, 128], strides = [1, 1, 1]} : vector<8x8x128xf32> to vector<1x8x128xf32>
    %119 = vector.shape_cast %118 : vector<1x8x128xf32> to vector<8x128xf32>
    %120 = arith.truncf %104 : vector<8x128xf32> to vector<8x128xbf16>
    %cst_26 = arith.constant dense<0.000000e+00> : vector<8x128xf32>
    %121 = tpu.matmul %120, %13, %cst_26 {dimension_numbers = #tpu.dot_dimension_numbers<[1], [0], [0], [1], [0, 0, 1, 1], [], []>} : vector<8x128xbf16>, vector<128x128xbf16>, vector<8x128xf32> -> vector<8x128xf32>
    %122 = arith.addf %119, %121 : vector<8x128xf32>
    %123 = vector.extract_strided_slice %15 {offsets = [4, 0, 0], sizes = [1, 8, 128], strides = [1, 1, 1]} : vector<8x8x128xf32> to vector<1x8x128xf32>
    %124 = vector.shape_cast %123 : vector<1x8x128xf32> to vector<8x128xf32>
    %125 = arith.truncf %105 : vector<8x128xf32> to vector<8x128xbf16>
    %cst_27 = arith.constant dense<0.000000e+00> : vector<8x128xf32>
    %126 = tpu.matmul %125, %13, %cst_27 {dimension_numbers = #tpu.dot_dimension_numbers<[1], [0], [0], [1], [0, 0, 1, 1], [], []>} : vector<8x128xbf16>, vector<128x128xbf16>, vector<8x128xf32> -> vector<8x128xf32>
    %127 = arith.addf %124, %126 : vector<8x128xf32>
    %128 = math.tanh %122 : vector<8x128xf32>
    %129 = math.tanh %127 : vector<8x128xf32>
    %c4_i32 = arith.constant 4 : i32
    %130 = vector.broadcast %c4_i32 : i32 to vector<8x1xi32>
    %131 = arith.cmpi sgt, %16, %130 : vector<8x1xi32>
    %132 = arith.maximumf %111, %128 : vector<8x128xf32>
    %133 = vector.shape_cast %131 : vector<8x1xi1> to vector<8x1xi1>
    %134 = vector.broadcast %133 : vector<8x1xi1> to vector<8x128xi1>
    %135 = arith.select %134, %132, %111 : vector<8x128xi1>, vector<8x128xf32>
    %c4_i32_28 = arith.constant 4 : i32
    %136 = vector.broadcast %c4_i32_28 : i32 to vector<8x1xi32>
    %137 = arith.cmpi sgt, %17, %136 : vector<8x1xi32>
    %138 = arith.maximumf %117, %129 : vector<8x128xf32>
    %139 = vector.shape_cast %137 : vector<8x1xi1> to vector<8x1xi1>
    %140 = vector.broadcast %139 : vector<8x1xi1> to vector<8x128xi1>
    %141 = arith.select %140, %138, %117 : vector<8x128xi1>, vector<8x128xf32>
    %142 = vector.extract_strided_slice %14 {offsets = [5, 0, 0], sizes = [1, 8, 128], strides = [1, 1, 1]} : vector<8x8x128xf32> to vector<1x8x128xf32>
    %143 = vector.shape_cast %142 : vector<1x8x128xf32> to vector<8x128xf32>
    %144 = arith.truncf %128 : vector<8x128xf32> to vector<8x128xbf16>
    %cst_29 = arith.constant dense<0.000000e+00> : vector<8x128xf32>
    %145 = tpu.matmul %144, %13, %cst_29 {dimension_numbers = #tpu.dot_dimension_numbers<[1], [0], [0], [1], [0, 0, 1, 1], [], []>} : vector<8x128xbf16>, vector<128x128xbf16>, vector<8x128xf32> -> vector<8x128xf32>
    %146 = arith.addf %143, %145 : vector<8x128xf32>
    %147 = vector.extract_strided_slice %15 {offsets = [5, 0, 0], sizes = [1, 8, 128], strides = [1, 1, 1]} : vector<8x8x128xf32> to vector<1x8x128xf32>
    %148 = vector.shape_cast %147 : vector<1x8x128xf32> to vector<8x128xf32>
    %149 = arith.truncf %129 : vector<8x128xf32> to vector<8x128xbf16>
    %cst_30 = arith.constant dense<0.000000e+00> : vector<8x128xf32>
    %150 = tpu.matmul %149, %13, %cst_30 {dimension_numbers = #tpu.dot_dimension_numbers<[1], [0], [0], [1], [0, 0, 1, 1], [], []>} : vector<8x128xbf16>, vector<128x128xbf16>, vector<8x128xf32> -> vector<8x128xf32>
    %151 = arith.addf %148, %150 : vector<8x128xf32>
    %152 = math.tanh %146 : vector<8x128xf32>
    %153 = math.tanh %151 : vector<8x128xf32>
    %c5_i32 = arith.constant 5 : i32
    %154 = vector.broadcast %c5_i32 : i32 to vector<8x1xi32>
    %155 = arith.cmpi sgt, %16, %154 : vector<8x1xi32>
    %156 = arith.maximumf %135, %152 : vector<8x128xf32>
    %157 = vector.shape_cast %155 : vector<8x1xi1> to vector<8x1xi1>
    %158 = vector.broadcast %157 : vector<8x1xi1> to vector<8x128xi1>
    %159 = arith.select %158, %156, %135 : vector<8x128xi1>, vector<8x128xf32>
    %c5_i32_31 = arith.constant 5 : i32
    %160 = vector.broadcast %c5_i32_31 : i32 to vector<8x1xi32>
    %161 = arith.cmpi sgt, %17, %160 : vector<8x1xi32>
    %162 = arith.maximumf %141, %153 : vector<8x128xf32>
    %163 = vector.shape_cast %161 : vector<8x1xi1> to vector<8x1xi1>
    %164 = vector.broadcast %163 : vector<8x1xi1> to vector<8x128xi1>
    %165 = arith.select %164, %162, %141 : vector<8x128xi1>, vector<8x128xf32>
    %166 = vector.extract_strided_slice %14 {offsets = [6, 0, 0], sizes = [1, 8, 128], strides = [1, 1, 1]} : vector<8x8x128xf32> to vector<1x8x128xf32>
    %167 = vector.shape_cast %166 : vector<1x8x128xf32> to vector<8x128xf32>
    %168 = arith.truncf %152 : vector<8x128xf32> to vector<8x128xbf16>
    %cst_32 = arith.constant dense<0.000000e+00> : vector<8x128xf32>
    %169 = tpu.matmul %168, %13, %cst_32 {dimension_numbers = #tpu.dot_dimension_numbers<[1], [0], [0], [1], [0, 0, 1, 1], [], []>} : vector<8x128xbf16>, vector<128x128xbf16>, vector<8x128xf32> -> vector<8x128xf32>
    %170 = arith.addf %167, %169 : vector<8x128xf32>
    %171 = vector.extract_strided_slice %15 {offsets = [6, 0, 0], sizes = [1, 8, 128], strides = [1, 1, 1]} : vector<8x8x128xf32> to vector<1x8x128xf32>
    %172 = vector.shape_cast %171 : vector<1x8x128xf32> to vector<8x128xf32>
    %173 = arith.truncf %153 : vector<8x128xf32> to vector<8x128xbf16>
    %cst_33 = arith.constant dense<0.000000e+00> : vector<8x128xf32>
    %174 = tpu.matmul %173, %13, %cst_33 {dimension_numbers = #tpu.dot_dimension_numbers<[1], [0], [0], [1], [0, 0, 1, 1], [], []>} : vector<8x128xbf16>, vector<128x128xbf16>, vector<8x128xf32> -> vector<8x128xf32>
    %175 = arith.addf %172, %174 : vector<8x128xf32>
    %176 = math.tanh %170 : vector<8x128xf32>
    %177 = math.tanh %175 : vector<8x128xf32>
    %c6_i32 = arith.constant 6 : i32
    %178 = vector.broadcast %c6_i32 : i32 to vector<8x1xi32>
    %179 = arith.cmpi sgt, %16, %178 : vector<8x1xi32>
    %180 = arith.maximumf %159, %176 : vector<8x128xf32>
    %181 = vector.shape_cast %179 : vector<8x1xi1> to vector<8x1xi1>
    %182 = vector.broadcast %181 : vector<8x1xi1> to vector<8x128xi1>
    %183 = arith.select %182, %180, %159 : vector<8x128xi1>, vector<8x128xf32>
    %c6_i32_34 = arith.constant 6 : i32
    %184 = vector.broadcast %c6_i32_34 : i32 to vector<8x1xi32>
    %185 = arith.cmpi sgt, %17, %184 : vector<8x1xi32>
    %186 = arith.maximumf %165, %177 : vector<8x128xf32>
    %187 = vector.shape_cast %185 : vector<8x1xi1> to vector<8x1xi1>
    %188 = vector.broadcast %187 : vector<8x1xi1> to vector<8x128xi1>
    %189 = arith.select %188, %186, %165 : vector<8x128xi1>, vector<8x128xf32>
    %190 = vector.extract_strided_slice %14 {offsets = [7, 0, 0], sizes = [1, 8, 128], strides = [1, 1, 1]} : vector<8x8x128xf32> to vector<1x8x128xf32>
    %191 = vector.shape_cast %190 : vector<1x8x128xf32> to vector<8x128xf32>
    %192 = arith.truncf %176 : vector<8x128xf32> to vector<8x128xbf16>
    %cst_35 = arith.constant dense<0.000000e+00> : vector<8x128xf32>
    %193 = tpu.matmul %192, %13, %cst_35 {dimension_numbers = #tpu.dot_dimension_numbers<[1], [0], [0], [1], [0, 0, 1, 1], [], []>} : vector<8x128xbf16>, vector<128x128xbf16>, vector<8x128xf32> -> vector<8x128xf32>
    %194 = arith.addf %191, %193 : vector<8x128xf32>
    %195 = vector.extract_strided_slice %15 {offsets = [7, 0, 0], sizes = [1, 8, 128], strides = [1, 1, 1]} : vector<8x8x128xf32> to vector<1x8x128xf32>
    %196 = vector.shape_cast %195 : vector<1x8x128xf32> to vector<8x128xf32>
    %197 = arith.truncf %177 : vector<8x128xf32> to vector<8x128xbf16>
    %cst_36 = arith.constant dense<0.000000e+00> : vector<8x128xf32>
    %198 = tpu.matmul %197, %13, %cst_36 {dimension_numbers = #tpu.dot_dimension_numbers<[1], [0], [0], [1], [0, 0, 1, 1], [], []>} : vector<8x128xbf16>, vector<128x128xbf16>, vector<8x128xf32> -> vector<8x128xf32>
    %199 = arith.addf %196, %198 : vector<8x128xf32>
    %200 = math.tanh %194 : vector<8x128xf32>
    %201 = math.tanh %199 : vector<8x128xf32>
    %c7_i32 = arith.constant 7 : i32
    %202 = vector.broadcast %c7_i32 : i32 to vector<8x1xi32>
    %203 = arith.cmpi sgt, %16, %202 : vector<8x1xi32>
    %204 = arith.maximumf %183, %200 : vector<8x128xf32>
    %205 = vector.shape_cast %203 : vector<8x1xi1> to vector<8x1xi1>
    %206 = vector.broadcast %205 : vector<8x1xi1> to vector<8x128xi1>
    %207 = arith.select %206, %204, %183 : vector<8x128xi1>, vector<8x128xf32>
    %c7_i32_37 = arith.constant 7 : i32
    %208 = vector.broadcast %c7_i32_37 : i32 to vector<8x1xi32>
    %209 = arith.cmpi sgt, %17, %208 : vector<8x1xi32>
    %210 = arith.maximumf %189, %201 : vector<8x128xf32>
    %211 = vector.shape_cast %209 : vector<8x1xi1> to vector<8x1xi1>
    %212 = vector.broadcast %211 : vector<8x1xi1> to vector<8x128xi1>
    %213 = arith.select %212, %210, %189 : vector<8x128xi1>, vector<8x128xf32>
    %214 = tpu.concatenate %207, %213 in 0 : vector<8x128xf32>, vector<8x128xf32> -> vector<16x128xf32>
    %215 = arith.truncf %214 : vector<16x128xf32> to vector<16x128xbf16>
    %c0_38 = arith.constant 0 : index
    %c0_39 = arith.constant 0 : index
    %216 = vector.load %arg5[%c0_38, %c0_39] : memref<128x128xf32, #tpu.memory_space<vmem>>, vector<128x128xf32>
    %217 = arith.truncf %216 : vector<128x128xf32> to vector<128x128xbf16>
    %cst_40 = arith.constant dense<0.000000e+00> : vector<16x128xf32>
    %218 = tpu.matmul %215, %217, %cst_40 {dimension_numbers = #tpu.dot_dimension_numbers<[1], [0], [0], [1], [0, 0, 1, 1], [], []>} : vector<16x128xbf16>, vector<128x128xbf16>, vector<16x128xf32> -> vector<16x128xf32>
    %c0_41 = arith.constant 0 : index
    %c0_42 = arith.constant 0 : index
    %219 = vector.load %arg6[%c0_41, %c0_42] : memref<1x128xf32, #tpu.memory_space<vmem>>, vector<1x128xf32>
    %220 = vector.broadcast %219 : vector<1x128xf32> to vector<16x128xf32>
    %221 = arith.addf %218, %220 : vector<16x128xf32>
    %c0_43 = arith.constant 0 : index
    %c0_44 = arith.constant 0 : index
    %222 = vector.load %arg10[%c0_43, %c0_44] : memref<16x128xf32, #tpu.memory_space<vmem>>, vector<16x128xf32>
    tpu.vector_store %arg10[%c0_43, %c0_44], %221 {strides = array<i32>} : memref<16x128xf32, #tpu.memory_space<vmem>>, vector<16x128xf32>,
    %c0_45 = arith.constant 0 : index
    %c0_46 = arith.constant 0 : index
    %223 = vector.load %arg7[%c0_45, %c0_46] : memref<1x128xf32, #tpu.memory_space<vmem>>, vector<1x128xf32>
    %224 = vector.broadcast %223 : vector<1x128xf32> to vector<16x128xf32>
    %225 = arith.mulf %221, %224 : vector<16x128xf32>
    %cst_47 = arith.constant dense<0.000000e+00> : vector<16xf32>
    %226 = vector.multi_reduction <add>, %225, %cst_47 [1] : vector<16x128xf32> to vector<16xf32>
    %227 = vector.shape_cast %226 : vector<16xf32> to vector<16x1xf32>
    %cst_48 = arith.constant 5.000000e-01 : f32
    %228 = vector.broadcast %cst_48 : f32 to vector<16x1xf32>
    %229 = arith.mulf %228, %227 : vector<16x1xf32>
    %230 = math.tanh %229 : vector<16x1xf32>
    %cst_49 = arith.constant 1.000000e+00 : f32
    %231 = vector.broadcast %cst_49 : f32 to vector<16x1xf32>
    %232 = arith.addf %230, %231 : vector<16x1xf32>
    %cst_50 = arith.constant 5.000000e-01 : f32
    %233 = vector.broadcast %cst_50 : f32 to vector<16x1xf32>
    %234 = arith.mulf %233, %232 : vector<16x1xf32>
    %c0_51 = arith.constant 0 : index
    %235 = memref.load %arg9[%c0_51] : memref<3xf32, #tpu.memory_space<smem>>
    %c1 = arith.constant 1 : index
    %236 = memref.load %arg9[%c1] : memref<3xf32, #tpu.memory_space<smem>>
    %c2 = arith.constant 2 : index
    %237 = memref.load %arg9[%c2] : memref<3xf32, #tpu.memory_space<smem>>
    %c0_52 = arith.constant 0 : index
    %c0_53 = arith.constant 0 : index
    %238 = vector.load %arg8[%c0_52, %c0_53] : memref<16x1xi32, #tpu.memory_space<vmem>>, vector<16x1xi32>
    %239 = arith.sitofp %238 : vector<16x1xi32> to vector<16x1xf32>
    %cst_54 = arith.constant 1.000000e+00 : f32
    %240 = vector.broadcast %cst_54 : f32 to vector<16x1xf32>
    %241 = arith.cmpf oeq, %239, %240 : vector<16x1xf32>
    %242 = arith.extui %241 : vector<16x1xi1> to vector<16x1xi32>
    %243 = arith.sitofp %242 : vector<16x1xi32> to vector<16x1xf32>
    %cst_55 = arith.constant 1.000000e+00 : f32
    %244 = vector.broadcast %cst_55 : f32 to vector<16x1xf32>
    %245 = arith.subf %244, %243 : vector<16x1xf32>
    %246 = vector.shape_cast %243 : vector<16x1xf32> to vector<1x16x1xf32>
    %cst_56 = arith.constant dense<0.000000e+00> : vector<1xf32>
    %247 = vector.multi_reduction <add>, %246, %cst_56 [1, 2] : vector<1x16x1xf32> to vector<1xf32>
    %248 = vector.shape_cast %247 : vector<1xf32> to vector<1x1x1xf32>
    %249 = vector.extract %248[0, 0, 0] : f32 from vector<1x1x1xf32>
    %cst_57 = arith.constant 1.600000e+01 : f32
    %250 = arith.divf %249, %cst_57 : f32
    %cst_58 = arith.constant 1.000000e+00 : f32
    %251 = arith.subf %cst_58, %250 : f32
    %252 = vector.broadcast %235 : f32 to vector<16x1xf32>
    %253 = arith.subf %234, %252 : vector<16x1xf32>
    %254 = arith.mulf %253, %253 : vector<16x1xf32>
    %255 = arith.mulf %254, %243 : vector<16x1xf32>
    %256 = vector.shape_cast %255 : vector<16x1xf32> to vector<1x16x1xf32>
    %cst_59 = arith.constant dense<0.000000e+00> : vector<1xf32>
    %257 = vector.multi_reduction <add>, %256, %cst_59 [1, 2] : vector<1x16x1xf32> to vector<1xf32>
    %258 = vector.shape_cast %257 : vector<1xf32> to vector<1x1x1xf32>
    %259 = vector.extract %258[0, 0, 0] : f32 from vector<1x1x1xf32>
    %cst_60 = arith.constant 1.600000e+01 : f32
    %260 = arith.divf %259, %cst_60 : f32
    %261 = arith.mulf %251, %260 : f32
    %262 = vector.broadcast %236 : f32 to vector<16x1xf32>
    %263 = arith.subf %234, %262 : vector<16x1xf32>
    %264 = arith.mulf %263, %263 : vector<16x1xf32>
    %265 = arith.mulf %264, %245 : vector<16x1xf32>
    %266 = vector.shape_cast %265 : vector<16x1xf32> to vector<1x16x1xf32>
    %cst_61 = arith.constant dense<0.000000e+00> : vector<1xf32>
    %267 = vector.multi_reduction <add>, %266, %cst_61 [1, 2] : vector<1x16x1xf32> to vector<1xf32>
    %268 = vector.shape_cast %267 : vector<1xf32> to vector<1x1x1xf32>
    %269 = vector.extract %268[0, 0, 0] : f32 from vector<1x1x1xf32>
    %cst_62 = arith.constant 1.600000e+01 : f32
    %270 = arith.divf %269, %cst_62 : f32
    %271 = arith.mulf %250, %270 : f32
    %272 = arith.addf %261, %271 : f32
    %cst_63 = arith.constant 2.000000e+00 : f32
    %273 = arith.mulf %cst_63, %237 : f32
    %cst_64 = arith.constant 1.000000e+00 : f32
    %274 = arith.subf %cst_64, %250 : f32
    %275 = arith.mulf %250, %274 : f32
    %cst_65 = arith.constant 1.000000e+00 : f32
    %276 = arith.mulf %275, %cst_65 : f32
    %277 = vector.broadcast %250 : f32 to vector<16x1xf32>
    %278 = arith.mulf %277, %234 : vector<16x1xf32>
    %279 = arith.mulf %278, %245 : vector<16x1xf32>
    %cst_66 = arith.constant 1.000000e+00 : f32
    %280 = arith.subf %cst_66, %250 : f32
    %281 = vector.broadcast %280 : f32 to vector<16x1xf32>
    %282 = arith.mulf %281, %234 : vector<16x1xf32>
    %283 = arith.mulf %282, %243 : vector<16x1xf32>
    %284 = arith.subf %279, %283 : vector<16x1xf32>
    %285 = vector.shape_cast %284 : vector<16x1xf32> to vector<1x16x1xf32>
    %cst_67 = arith.constant dense<0.000000e+00> : vector<1xf32>
    %286 = vector.multi_reduction <add>, %285, %cst_67 [1, 2] : vector<1x16x1xf32> to vector<1xf32>
    %287 = vector.shape_cast %286 : vector<1xf32> to vector<1x1x1xf32>
    %288 = vector.extract %287[0, 0, 0] : f32 from vector<1x1x1xf32>
    %cst_68 = arith.constant 1.600000e+01 : f32
    %289 = arith.divf %288, %cst_68 : f32
    %290 = arith.addf %276, %289 : f32
    %291 = arith.mulf %273, %290 : f32
    %292 = arith.addf %272, %291 : f32
    %cst_69 = arith.constant 1.000000e+00 : f32
    %293 = arith.subf %cst_69, %250 : f32
    %294 = arith.mulf %250, %293 : f32
    %295 = arith.mulf %237, %237 : f32
    %296 = arith.mulf %294, %295 : f32
    %297 = arith.subf %292, %296 : f32
    %298 = vector.broadcast %297 : f32 to vector<1x1xf32>
    %c0_70 = arith.constant 0 : index
    %c0_71 = arith.constant 0 : index
    %299 = vector.load %arg11[%c0_70, %c0_71] : memref<1x1xf32, #tpu.memory_space<vmem>>, vector<1x1xf32>
    tpu.vector_store %arg11[%c0_70, %c0_71], %298 {strides = array<i32>} : memref<1x1xf32, #tpu.memory_space<vmem>>, vector<1x1xf32>,
    return
  }
}

</mosaic_0001>

<llo_original>
// kernel: rnn_aucm_forward.1
$region0: #{rnn_aucm_forward.1}
  #allocation0 [shape = 'u32[]', space=smem, size = 0x4, offset = 0x4, fixed_abs, tag = 'smem constant byte address 0x4 - core index']
  #allocation1 [shape = 'u32[144,128]{1,0:T(1,128)}', space=vmem, size = 0x12000, scoped, tag = 'internal scratch']
  %s0 = inlined_call_operand.vmem [shape: f32[8,16,128], index: 0, kind: input, shape index: {}]
  %s1 = inlined_call_operand.vmem [shape: s32[16,1], index: 1, kind: input, shape index: {}]
  %s2 = inlined_call_operand.vmem [shape: f32[128,128], index: 2, kind: input, shape index: {}]
  %s3 = inlined_call_operand.vmem [shape: f32[128,128], index: 3, kind: input, shape index: {}]
  %s4 = inlined_call_operand.vmem [shape: f32[1,128], index: 4, kind: input, shape index: {}]
  %s5 = inlined_call_operand.vmem [shape: f32[128,128], index: 5, kind: input, shape index: {}]
  %s6 = inlined_call_operand.vmem [shape: f32[1,128], index: 6, kind: input, shape index: {}]
  %s7 = inlined_call_operand.vmem [shape: f32[1,128], index: 7, kind: input, shape index: {}]
  %s8 = inlined_call_operand.vmem [shape: s32[16,1], index: 8, kind: input, shape index: {}]
  %s9 = inlined_call_operand.vmem [shape: f32[3], index: 9, kind: input, shape index: {}]
  %s10 = inlined_call_operand.vmem [shape: f32[16,128], index: 10, kind: output, shape index: {0}]
  %s11 = inlined_call_operand.hbm [shape: f32[1,1], index: 11, kind: output, shape index: {1}]
  %12 = xla_tuple %s10, %s11
  %s13 = sld [smem:[#allocation0]]
  $region62: #{rnn_aucm_forward.1} parent=0
    _
  %s15 = ssub.s32 1, %s13
  %s16 = scalar_select 0, %s15, %s13
  $region1: #{rnn_aucm_forward.1} parent=0
    #allocation2 [shape = 'u8[512]{0}', space=smem, size = 0x200, scoped, tag = 'input window, operand 9, single buffered']
    #allocation3 [shape = 's32[1]{0}', space=sflag, size = 0x4, scoped, tag = 'scoped memory for rnn_aucm_forward.1']
    #allocation4 [shape = 's32[1]{0}', space=sflag, size = 0x4, scoped, tag = 'scoped memory for rnn_aucm_forward.1']
    #allocation5 [shape = 'u8[512]{0}', space=vmem, size = 0x400, scoped, tag = 'output window, operand 1, single buffered']
    %17 = vsyncpa [#allocation4], 0
    %18 = vsyncpa [#allocation3], 0
    // Predicated region
    $region2: #{rnn_aucm_forward.1} parent=1 // pred_check
      _
    $region3: #{rnn_aucm_forward.1} parent=1 // pred_check_branch
      %20 = sbr.rel (0) target = $region5
    $region4: #{rnn_aucm_forward.1} parent=1 // pred_region
      _
    $region5: #{rnn_aucm_forward.1} parent=1 // pred_fallthru
      _
    // Predicated region
    $region6: #{rnn_aucm_forward.1} parent=1 // pred_check
      _
    $region7: #{rnn_aucm_forward.1} parent=1 // pred_check_branch
      %22 = sbr.rel (0) target = $region9
    $region8: #{rnn_aucm_forward.1} parent=1 // pred_region
      _
    $region9: #{rnn_aucm_forward.1} parent=1 // pred_fallthru
      _
    // Predicated region
    $region10: #{rnn_aucm_forward.1} parent=1 // pred_check
      _
    $region11: #{rnn_aucm_forward.1} parent=1 // pred_check_branch
      %24 = sbr.rel (0) target = $region13
    $region12: #{rnn_aucm_forward.1} parent=1 // pred_region
      _
    $region13: #{rnn_aucm_forward.1} parent=1 // pred_fallthru
      _
    // Predicated region
    $region14: #{rnn_aucm_forward.1} parent=1 // pred_check
      _
    $region15: #{rnn_aucm_forward.1} parent=1 // pred_check_branch
      %26 = sbr.rel (0) target = $region17
    $region16: #{rnn_aucm_forward.1} parent=1 // pred_region
      _
    $region17: #{rnn_aucm_forward.1} parent=1 // pred_fallthru
      _
    // Predicated region
    $region18: #{rnn_aucm_forward.1} parent=1 // pred_check
      _
    $region19: #{rnn_aucm_forward.1} parent=1 // pred_check_branch
      %28 = sbr.rel (0) target = $region21
    $region20: #{rnn_aucm_forward.1} parent=1 // pred_region
      _
    $region21: #{rnn_aucm_forward.1} parent=1 // pred_fallthru
      _
    // Predicated region
    $region22: #{rnn_aucm_forward.1} parent=1 // pred_check
      _
    $region23: #{rnn_aucm_forward.1} parent=1 // pred_check_branch
      %30 = sbr.rel (0) target = $region25
    $region24: #{rnn_aucm_forward.1} parent=1 // pred_region
      _
    $region25: #{rnn_aucm_forward.1} parent=1 // pred_fallthru
      _
    // Predicated region
    $region26: #{rnn_aucm_forward.1} parent=1 // pred_check
      _
    $region27: #{rnn_aucm_forward.1} parent=1 // pred_check_branch
      %32 = sbr.rel (0) target = $region29
    $region28: #{rnn_aucm_forward.1} parent=1 // pred_region
      _
    $region29: #{rnn_aucm_forward.1} parent=1 // pred_fallthru
      _
    // Predicated region
    $region30: #{rnn_aucm_forward.1} parent=1 // pred_check
      _
    $region31: #{rnn_aucm_forward.1} parent=1 // pred_check_branch
      %34 = sbr.rel (0) target = $region33
    $region32: #{rnn_aucm_forward.1} parent=1 // pred_region
      _
    $region33: #{rnn_aucm_forward.1} parent=1 // pred_fallthru
      _
    // Predicated region
    $region34: #{rnn_aucm_forward.1} parent=1 // pred_check
      _
    $region35: #{rnn_aucm_forward.1} parent=1 // pred_check_branch
      %36 = sbr.rel (0) target = $region37
    $region36: #{rnn_aucm_forward.1} parent=1 // pred_region
      _
    $region37: #{rnn_aucm_forward.1} parent=1 // pred_fallthru
      _
    // Predicated region
    $region38: #{rnn_aucm_forward.1} parent=1 // pred_check
      _
    $region39: #{rnn_aucm_forward.1} parent=1 // pred_check_branch
      %38 = sbr.rel (0) target = $region41
    $region40: #{rnn_aucm_forward.1} parent=1 // pred_region
      %s40 = ssub.s32 16, 16
      %41 = vsyncadd [#allocation4], %s40
      %s43 = sshll.u32 %s9, 4
      %s44 = int_to_ptr.vmem [resolvable:$true] %s43
      %46 = dma.vmem_to_smem %s44, 16, [#allocation2], [#allocation4]
    $region41: #{rnn_aucm_forward.1} parent=1 // pred_fallthru
      _
    // Predicated region
    $region42: #{rnn_aucm_forward.1} parent=1 // pred_check
      _
    $region43: #{rnn_aucm_forward.1} parent=1 // pred_check_branch
      %48 = sbr.rel (0) target = $region45
    $region44: #{rnn_aucm_forward.1} parent=1 // pred_region
      %49 = dma.done [#allocation4], 16
    $region45: #{rnn_aucm_forward.1} parent=1 // pred_fallthru
      _
    %50 = sfence
    %v52 = vld [vmem:[%s1] sm:$0xff]
    %v53 = vld [vmem:[%s1 + $0x8] sm:$0xff]
    %v54 = vld [vmem:[%s0] sm:$0xff]
    %v55 = vld [vmem:[%s0 + $0x8] sm:$0xff]
    %v56 = vld [vmem:[%s0 + $0x10] sm:$0xff]
    %v57 = vld [vmem:[%s0 + $0x18] sm:$0xff]
    %v58 = vld [vmem:[%s0 + $0x20] sm:$0xff]
    %v59 = vld [vmem:[%s0 + $0x28] sm:$0xff]
    %v60 = vld [vmem:[%s0 + $0x30] sm:$0xff]
    %v61 = vld [vmem:[%s0 + $0x38] sm:$0xff]
    %v62 = vld [vmem:[%s0 + $0x40] sm:$0xff]
    %v63 = vld [vmem:[%s0 + $0x48] sm:$0xff]
    %v64 = vld [vmem:[%s0 + $0x50] sm:$0xff]
    %v65 = vld [vmem:[%s0 + $0x58] sm:$0xff]
    %v66 = vld [vmem:[%s0 + $0x60] sm:$0xff]
    %v67 = vld [vmem:[%s0 + $0x68] sm:$0xff]
    %v68 = vld [vmem:[%s0 + $0x70] sm:$0xff]
    %v69 = vld [vmem:[%s0 + $0x78] sm:$0xff]
    %v70 = vpack.c.bf16 %v55, %v54
    %v71 = vpack.c.bf16 %v57, %v56
    %v72 = vpack.c.bf16 %v59, %v58
    %v73 = vpack.c.bf16 %v61, %v60
    %v74 = vpack.c.bf16 %v63, %v62
    %v75 = vpack.c.bf16 %v65, %v64
    %v76 = vpack.c.bf16 %v67, %v66
    %v77 = vpack.c.bf16 %v69, %v68
    %v78 = vld [vmem:[%s2] sm:$0xff]
    %v79 = vld [vmem:[%s2 + $0x8] sm:$0xff]
    %v80 = vld [vmem:[%s2 + $0x10] sm:$0xff]
    %v81 = vld [vmem:[%s2 + $0x18] sm:$0xff]
    %v82 = vld [vmem:[%s2 + $0x20] sm:$0xff]
    %v83 = vld [vmem:[%s2 + $0x28] sm:$0xff]
    %v84 = vld [vmem:[%s2 + $0x30] sm:$0xff]
    %v85 = vld [vmem:[%s2 + $0x38] sm:$0xff]
    %v86 = vld [vmem:[%s2 + $0x40] sm:$0xff]
    %v87 = vld [vmem:[%s2 + $0x48] sm:$0xff]
    %v88 = vld [vmem:[%s2 + $0x50] sm:$0xff]
    %v89 = vld [vmem:[%s2 + $0x58] sm:$0xff]
    %v90 = vld [vmem:[%s2 + $0x60] sm:$0xff]
    %v91 = vld [vmem:[%s2 + $0x68] sm:$0xff]
    %v92 = vld [vmem:[%s2 + $0x70] sm:$0xff]
    %v93 = vld [vmem:[%s2 + $0x78] sm:$0xff]
    %v94 = vpack.c.bf16 %v79, %v78
    %v95 = vpack.c.bf16 %v81, %v80
    %v96 = vpack.c.bf16 %v83, %v82
    %v97 = vpack.c.bf16 %v85, %v84
    %v98 = vpack.c.bf16 %v87, %v86
    %v99 = vpack.c.bf16 %v89, %v88
    %v100 = vpack.c.bf16 %v91, %v90
    %v101 = vpack.c.bf16 %v93, %v92
    %102 = vmatprep.subr.bf16.mxu0 0
    %103 = vmatpush1.bf16.msra.mxu0 %v94
    %104 = vmatprep.subr.bf16.mxu0 0
    %105 = vmatpush1.bf16.msra.mxu0 %v95
    %106 = vmatprep.subr.bf16.mxu0 0
    %107 = vmatpush1.bf16.msra.mxu0 %v96
    %108 = vmatprep.subr.bf16.mxu0 0
    %109 = vmatpush1.bf16.msra.mxu0 %v97
    %110 = vmatprep.subr.bf16.mxu0 0
    %111 = vmatpush1.bf16.msra.mxu0 %v98
    %112 = vmatprep.subr.bf16.mxu0 0
    %113 = vmatpush1.bf16.msra.mxu0 %v99
    %114 = vmatprep.subr.bf16.mxu0 0
    %115 = vmatpush1.bf16.msra.mxu0 %v100
    %116 = vmatprep.subr.bf16.mxu0 0
    %117 = vmatpush1.bf16.msra.mxu0 %v101
    %118 = vmatprep.subr.bf16.mxu0 0
    %119 = vmatpush1.bf16.msra.mxu0 0
    %120 = vmatprep.subr.bf16.mxu0 0
    %121 = vmatpush1.bf16.msra.mxu0 0
    %122 = vmatprep.subr.bf16.mxu0 0
    %123 = vmatpush1.bf16.msra.mxu0 0
    %124 = vmatprep.subr.bf16.mxu0 0
    %125 = vmatpush1.bf16.msra.mxu0 0
    %126 = vmatprep.subr.bf16.mxu0 0
    %127 = vmatpush1.bf16.msra.mxu0 0
    %128 = vmatprep.subr.bf16.mxu0 0
    %129 = vmatpush1.bf16.msra.mxu0 0
    %130 = vmatprep.subr.bf16.mxu0 0
    %131 = vmatpush1.bf16.msra.mxu0 0
    %132 = vmatprep.subr.bf16.mxu0 0
    %133 = vmatpush1.bf16.msra.mxu0 0
    %134 = vmatprep.mubr.bf16.mxu0 0
    %135 = vmatmul.mubr.bf16.gmra.mrb[0].mxu0 %v70
    %v136 = vpop.f32.mrb[0].mxu0
    %v137 = vadd.f32 0.0, %v136
    %v138 = vpop.f32.mrb[0].mxu0
    %v139 = vpop.f32.mrb[0].mxu0
    %v140 = vadd.f32 0.0, %v139
    %v141 = vpop.f32.mrb[0].mxu0
    %142 = vmatprep.mubr.bf16.mxu0 0
    %143 = vmatmul.mubr.bf16.gmra.mrb[0].mxu0 %v71
    %v144 = vpop.f32.mrb[0].mxu0
    %v145 = vadd.f32 0.0, %v144
    %v146 = vpop.f32.mrb[0].mxu0
    %v147 = vpop.f32.mrb[0].mxu0
    %v148 = vadd.f32 0.0, %v147
    %v149 = vpop.f32.mrb[0].mxu0
    %150 = vmatprep.mubr.bf16.mxu0 0
    %151 = vmatmul.mubr.bf16.gmra.mrb[0].mxu0 %v72
    %v152 = vpop.f32.mrb[0].mxu0
    %v153 = vadd.f32 0.0, %v152
    %v154 = vpop.f32.mrb[0].mxu0
    %v155 = vpop.f32.mrb[0].mxu0
    %v156 = vadd.f32 0.0, %v155
    %v157 = vpop.f32.mrb[0].mxu0
    %158 = vmatprep.mubr.bf16.mxu0 0
    %159 = vmatmul.mubr.bf16.gmra.mrb[0].mxu0 %v73
    %v160 = vpop.f32.mrb[0].mxu0
    %v161 = vadd.f32 0.0, %v160
    %v162 = vpop.f32.mrb[0].mxu0
    %v163 = vpop.f32.mrb[0].mxu0
    %v164 = vadd.f32 0.0, %v163
    %v165 = vpop.f32.mrb[0].mxu0
    %166 = vmatprep.mubr.bf16.mxu0 0
    %167 = vmatmul.mubr.bf16.gmra.mrb[0].mxu0 %v74
    %v168 = vpop.f32.mrb[0].mxu0
    %v169 = vadd.f32 0.0, %v168
    %v170 = vpop.f32.mrb[0].mxu0
    %v171 = vpop.f32.mrb[0].mxu0
    %v172 = vadd.f32 0.0, %v171
    %v173 = vpop.f32.mrb[0].mxu0
    %174 = vmatprep.mubr.bf16.mxu0 0
    %175 = vmatmul.mubr.bf16.gmra.mrb[0].mxu0 %v75
    %v176 = vpop.f32.mrb[0].mxu0
    %v177 = vadd.f32 0.0, %v176
    %v178 = vpop.f32.mrb[0].mxu0
    %v179 = vpop.f32.mrb[0].mxu0
    %v180 = vadd.f32 0.0, %v179
    %v181 = vpop.f32.mrb[0].mxu0
    %182 = vmatprep.mubr.bf16.mxu0 0
    %183 = vmatmul.mubr.bf16.gmra.mrb[0].mxu0 %v76
    %v184 = vpop.f32.mrb[0].mxu0
    %v185 = vadd.f32 0.0, %v184
    %v186 = vpop.f32.mrb[0].mxu0
    %v187 = vpop.f32.mrb[0].mxu0
    %v188 = vadd.f32 0.0, %v187
    %v189 = vpop.f32.mrb[0].mxu0
    %190 = vmatprep.mubr.bf16.mxu0 0
    %191 = vmatmul.mubr.bf16.gmra.mrb[0].mxu0 %v77
    %v192 = vpop.f32.mrb[0].mxu0
    %v193 = vadd.f32 0.0, %v192
    %v194 = vpop.f32.mrb[0].mxu0
    %v195 = vpop.f32.mrb[0].mxu0
    %v196 = vadd.f32 0.0, %v195
    %v197 = vpop.f32.mrb[0].mxu0
    %198 = vdwg.mxu0
    %v199 = vld [vmem:[%s4] sm:$0x1]
    %v201 = vlaneseq
    %v202 = vshrl.u32 %v201, 7
    %v203 = vsub.s32 0, %v202
    %v204 = vrot.slane %v199, %v203
    %v206 = vadd.f32 %v137, %v204
    %v207 = vadd.f32 %v140, %v204
    %v208 = vadd.f32 %v145, %v204
    %v209 = vadd.f32 %v148, %v204
    %v210 = vadd.f32 %v153, %v204
    %v211 = vadd.f32 %v156, %v204
    %v212 = vadd.f32 %v161, %v204
    %v213 = vadd.f32 %v164, %v204
    %v214 = vadd.f32 %v169, %v204
    %v215 = vadd.f32 %v172, %v204
    %v216 = vadd.f32 %v177, %v204
    %v217 = vadd.f32 %v180, %v204
    %v218 = vadd.f32 %v185, %v204
    %v219 = vadd.f32 %v188, %v204
    %v220 = vadd.f32 %v193, %v204
    %v221 = vadd.f32 %v196, %v204
    %v222 = vld [vmem:[%s3] sm:$0xff]
    %v223 = vld [vmem:[%s3 + $0x8] sm:$0xff]
    %v224 = vld [vmem:[%s3 + $0x10] sm:$0xff]
    %v225 = vld [vmem:[%s3 + $0x18] sm:$0xff]
    %v226 = vld [vmem:[%s3 + $0x20] sm:$0xff]
    %v227 = vld [vmem:[%s3 + $0x28] sm:$0xff]
    %v228 = vld [vmem:[%s3 + $0x30] sm:$0xff]
    %v229 = vld [vmem:[%s3 + $0x38] sm:$0xff]
    %v230 = vld [vmem:[%s3 + $0x40] sm:$0xff]
    %v231 = vld [vmem:[%s3 + $0x48] sm:$0xff]
    %v232 = vld [vmem:[%s3 + $0x50] sm:$0xff]
    %v233 = vld [vmem:[%s3 + $0x58] sm:$0xff]
    %v234 = vld [vmem:[%s3 + $0x60] sm:$0xff]
    %v235 = vld [vmem:[%s3 + $0x68] sm:$0xff]
    %v236 = vld [vmem:[%s3 + $0x70] sm:$0xff]
    %v237 = vld [vmem:[%s3 + $0x78] sm:$0xff]
    %v238 = vpack.c.bf16 %v223, %v222
    %v239 = vpack.c.bf16 %v225, %v224
    %v240 = vpack.c.bf16 %v227, %v226
    %v241 = vpack.c.bf16 %v229, %v228
    %v242 = vpack.c.bf16 %v231, %v230
    %v243 = vpack.c.bf16 %v233, %v232
    %v244 = vpack.c.bf16 %v235, %v234
    %v245 = vpack.c.bf16 %v237, %v236
    %246 = vmatprep.subr.bf16.mxu0 0
    %247 = vmatpush1.bf16.msra.mxu0 %v238
    %248 = vmatprep.subr.bf16.mxu0 0
    %249 = vmatpush1.bf16.msra.mxu0 %v239
    %250 = vmatprep.subr.bf16.mxu0 0
    %251 = vmatpush1.bf16.msra.mxu0 %v240
    %252 = vmatprep.subr.bf16.mxu0 0
    %253 = vmatpush1.bf16.msra.mxu0 %v241
    %254 = vmatprep.subr.bf16.mxu0 0
    %255 = vmatpush1.bf16.msra.mxu0 %v242
    %256 = vmatprep.subr.bf16.mxu0 0
    %257 = vmatpush1.bf16.msra.mxu0 %v243
    %258 = vmatprep.subr.bf16.mxu0 0
    %259 = vmatpush1.bf16.msra.mxu0 %v244
    %260 = vmatprep.subr.bf16.mxu0 0
    %261 = vmatpush1.bf16.msra.mxu0 %v245
    %262 = vmatprep.subr.bf16.mxu0 0
    %263 = vmatpush1.bf16.msra.mxu0 0
    %264 = vmatprep.subr.bf16.mxu0 0
    %265 = vmatpush1.bf16.msra.mxu0 0
    %266 = vmatprep.subr.bf16.mxu0 0
    %267 = vmatpush1.bf16.msra.mxu0 0
    %268 = vmatprep.subr.bf16.mxu0 0
    %269 = vmatpush1.bf16.msra.mxu0 0
    %270 = vmatprep.subr.bf16.mxu0 0
    %271 = vmatpush1.bf16.msra.mxu0 0
    %272 = vmatprep.subr.bf16.mxu0 0
    %273 = vmatpush1.bf16.msra.mxu0 0
    %274 = vmatprep.subr.bf16.mxu0 0
    %275 = vmatpush1.bf16.msra.mxu0 0
    %276 = vmatprep.subr.bf16.mxu0 0
    %277 = vmatpush1.bf16.msra.mxu0 0
    %278 = vmatprep.mubr.bf16.mxu0 0
    %279 = vmatmul.mubr.bf16.gmra.mrb[0].mxu0 0
    %v280 = vpop.f32.mrb[0].mxu0
    %v281 = vadd.f32 0.0, %v280
    %v282 = vpop.f32.mrb[0].mxu0
    %v283 = vpop.f32.mrb[0].mxu0
    %v284 = vpop.f32.mrb[0].mxu0
    %285 = vdwg.mxu0
    %v286 = vadd.f32 %v206, %v281
    %v287 = vadd.f32 %v207, %v281
    %v288 = vtanh.pop %v286
    %v289 = vtanh.pop %v287
    %vm290 = vcmp.gt.s32.totalorder %v52, 0
    %v291 = vmax.f32 %v288, -1e+30
    %v292 = vsel %vm290, 1, 0
    %293 = vset.pattern.permute.xlu0 0
    %294 = vperm.xlu0 %293, %v292
    %v295 = vpop.permute.xlu0 %294
    %vm296 = vcmp.eq.s32.totalorder %v295, 1
    %v297 = vsel %vm296, %v291, -1e+30
    %vm298 = vcmp.gt.s32.totalorder %v53, 0
    %v299 = vmax.f32 %v289, -1e+30
    %v300 = vsel %vm298, 1, 0
    %301 = vset.pattern.permute.xlu0 0
    %302 = vperm.xlu0 %301, %v300
    %v303 = vpop.permute.xlu0 %302
    %vm304 = vcmp.eq.s32.totalorder %v303, 1
    %v305 = vsel %vm304, %v299, -1e+30
    %v306 = vpack.c.bf16 %v288, %v288
    %307 = vmatprep.subr.bf16.mxu0 0
    %308 = vmatpush1.bf16.msra.mxu0 %v238
    %309 = vmatprep.subr.bf16.mxu0 0
    %310 = vmatpush1.bf16.msra.mxu0 %v239
    %311 = vmatprep.subr.bf16.mxu0 0
    %312 = vmatpush1.bf16.msra.mxu0 %v240
    %313 = vmatprep.subr.bf16.mxu0 0
    %314 = vmatpush1.bf16.msra.mxu0 %v241
    %315 = vmatprep.subr.bf16.mxu0 0
    %316 = vmatpush1.bf16.msra.mxu0 %v242
    %317 = vmatprep.subr.bf16.mxu0 0
    %318 = vmatpush1.bf16.msra.mxu0 %v243
    %319 = vmatprep.subr.bf16.mxu0 0
    %320 = vmatpush1.bf16.msra.mxu0 %v244
    %321 = vmatprep.subr.bf16.mxu0 0
    %322 = vmatpush1.bf16.msra.mxu0 %v245
    %323 = vmatprep.subr.bf16.mxu0 0
    %324 = vmatpush1.bf16.msra.mxu0 0
    %325 = vmatprep.subr.bf16.mxu0 0
    %326 = vmatpush1.bf16.msra.mxu0 0
    %327 = vmatprep.subr.bf16.mxu0 0
    %328 = vmatpush1.bf16.msra.mxu0 0
    %329 = vmatprep.subr.bf16.mxu0 0
    %330 = vmatpush1.bf16.msra.mxu0 0
    %331 = vmatprep.subr.bf16.mxu0 0
    %332 = vmatpush1.bf16.msra.mxu0 0
    %333 = vmatprep.subr.bf16.mxu0 0
    %334 = vmatpush1.bf16.msra.mxu0 0
    %335 = vmatprep.subr.bf16.mxu0 0
    %336 = vmatpush1.bf16.msra.mxu0 0
    %337 = vmatprep.subr.bf16.mxu0 0
    %338 = vmatpush1.bf16.msra.mxu0 0
    %339 = vmatprep.mubr.bf16.mxu0 0
    %340 = vmatmul.mubr.bf16.gmra.mrb[0].mxu0 %v306
    %v341 = vpop.f32.mrb[0].mxu0
    %v342 = vadd.f32 0.0, %v341
    %v343 = vpop.f32.mrb[0].mxu0
    %v344 = vpop.f32.mrb[0].mxu0
    %v345 = vpop.f32.mrb[0].mxu0
    %346 = vdwg.mxu0
    %v347 = vadd.f32 %v208, %v342
    %v348 = vpack.c.bf16 %v289, %v289
    %349 = vmatprep.subr.bf16.mxu0 0
    %350 = vmatpush1.bf16.msra.mxu0 %v238
    %351 = vmatprep.subr.bf16.mxu0 0
    %352 = vmatpush1.bf16.msra.mxu0 %v239
    %353 = vmatprep.subr.bf16.mxu0 0
    %354 = vmatpush1.bf16.msra.mxu0 %v240
    %355 = vmatprep.subr.bf16.mxu0 0
    %356 = vmatpush1.bf16.msra.mxu0 %v241
    %357 = vmatprep.subr.bf16.mxu0 0
    %358 = vmatpush1.bf16.msra.mxu0 %v242
    %359 = vmatprep.subr.bf16.mxu0 0
    %360 = vmatpush1.bf16.msra.mxu0 %v243
    %361 = vmatprep.subr.bf16.mxu0 0
    %362 = vmatpush1.bf16.msra.mxu0 %v244
    %363 = vmatprep.subr.bf16.mxu0 0
    %364 = vmatpush1.bf16.msra.mxu0 %v245
    %365 = vmatprep.subr.bf16.mxu0 0
    %366 = vmatpush1.bf16.msra.mxu0 0
    %367 = vmatprep.subr.bf16.mxu0 0
    %368 = vmatpush1.bf16.msra.mxu0 0
    %369 = vmatprep.subr.bf16.mxu0 0
    %370 = vmatpush1.bf16.msra.mxu0 0
    %371 = vmatprep.subr.bf16.mxu0 0
    %372 = vmatpush1.bf16.msra.mxu0 0
    %373 = vmatprep.subr.bf16.mxu0 0
    %374 = vmatpush1.bf16.msra.mxu0 0
    %375 = vmatprep.subr.bf16.mxu0 0
    %376 = vmatpush1.bf16.msra.mxu0 0
    %377 = vmatprep.subr.bf16.mxu0 0
    %378 = vmatpush1.bf16.msra.mxu0 0
    %379 = vmatprep.subr.bf16.mxu0 0
    %380 = vmatpush1.bf16.msra.mxu0 0
    %381 = vmatprep.mubr.bf16.mxu0 0
    %382 = vmatmul.mubr.bf16.gmra.mrb[0].mxu0 %v348
    %v383 = vpop.f32.mrb[0].mxu0
    %v384 = vadd.f32 0.0, %v383
    %v385 = vpop.f32.mrb[0].mxu0
    %v386 = vpop.f32.mrb[0].mxu0
    %v387 = vpop.f32.mrb[0].mxu0
    %388 = vdwg.mxu0
    %v389 = vadd.f32 %v209, %v384
    %v390 = vtanh.pop %v347
    %v391 = vtanh.pop %v389
    %vm392 = vcmp.gt.s32.totalorder %v52, 1
    %v393 = vmax.f32 %v297, %v390
    %v394 = vsel %vm392, 1, 0
    %395 = vset.pattern.permute.xlu0 0
    %396 = vperm.xlu0 %395, %v394
    %v397 = vpop.permute.xlu0 %396
    %vm398 = vcmp.eq.s32.totalorder %v397, 1
    %v399 = vsel %vm398, %v393, %v297
    %vm400 = vcmp.gt.s32.totalorder %v53, 1
    %v401 = vmax.f32 %v305, %v391
    %v402 = vsel %vm400, 1, 0
    %403 = vset.pattern.permute.xlu0 0
    %404 = vperm.xlu0 %403, %v402
    %v405 = vpop.permute.xlu0 %404
    %vm406 = vcmp.eq.s32.totalorder %v405, 1
    %v407 = vsel %vm406, %v401, %v305
    %v408 = vpack.c.bf16 %v390, %v390
    %409 = vmatprep.subr.bf16.mxu0 0
    %410 = vmatpush1.bf16.msra.mxu0 %v238
    %411 = vmatprep.subr.bf16.mxu0 0
    %412 = vmatpush1.bf16.msra.mxu0 %v239
    %413 = vmatprep.subr.bf16.mxu0 0
    %414 = vmatpush1.bf16.msra.mxu0 %v240
    %415 = vmatprep.subr.bf16.mxu0 0
    %416 = vmatpush1.bf16.msra.mxu0 %v241
    %417 = vmatprep.subr.bf16.mxu0 0
    %418 = vmatpush1.bf16.msra.mxu0 %v242
    %419 = vmatprep.subr.bf16.mxu0 0
    %420 = vmatpush1.bf16.msra.mxu0 %v243
    %421 = vmatprep.subr.bf16.mxu0 0
    %422 = vmatpush1.bf16.msra.mxu0 %v244
    %423 = vmatprep.subr.bf16.mxu0 0
    %424 = vmatpush1.bf16.msra.mxu0 %v245
    %425 = vmatprep.subr.bf16.mxu0 0
    %426 = vmatpush1.bf16.msra.mxu0 0
    %427 = vmatprep.subr.bf16.mxu0 0
    %428 = vmatpush1.bf16.msra.mxu0 0
    %429 = vmatprep.subr.bf16.mxu0 0
    %430 = vmatpush1.bf16.msra.mxu0 0
    %431 = vmatprep.subr.bf16.mxu0 0
    %432 = vmatpush1.bf16.msra.mxu0 0
    %433 = vmatprep.subr.bf16.mxu0 0
    %434 = vmatpush1.bf16.msra.mxu0 0
    %435 = vmatprep.subr.bf16.mxu0 0
    %436 = vmatpush1.bf16.msra.mxu0 0
    %437 = vmatprep.subr.bf16.mxu0 0
    %438 = vmatpush1.bf16.msra.mxu0 0
    %439 = vmatprep.subr.bf16.mxu0 0
    %440 = vmatpush1.bf16.msra.mxu0 0
    %441 = vmatprep.mubr.bf16.mxu0 0
    %442 = vmatmul.mubr.bf16.gmra.mrb[0].mxu0 %v408
    %v443 = vpop.f32.mrb[0].mxu0
    %v444 = vadd.f32 0.0, %v443
    %v445 = vpop.f32.mrb[0].mxu0
    %v446 = vpop.f32.mrb[0].mxu0
    %v447 = vpop.f32.mrb[0].mxu0
    %448 = vdwg.mxu0
    %v449 = vadd.f32 %v210, %v444
    %v450 = vpack.c.bf16 %v391, %v391
    %451 = vmatprep.subr.bf16.mxu0 0
    %452 = vmatpush1.bf16.msra.mxu0 %v238
    %453 = vmatprep.subr.bf16.mxu0 0
    %454 = vmatpush1.bf16.msra.mxu0 %v239
    %455 = vmatprep.subr.bf16.mxu0 0
    %456 = vmatpush1.bf16.msra.mxu0 %v240
    %457 = vmatprep.subr.bf16.mxu0 0
    %458 = vmatpush1.bf16.msra.mxu0 %v241
    %459 = vmatprep.subr.bf16.mxu0 0
    %460 = vmatpush1.bf16.msra.mxu0 %v242
    %461 = vmatprep.subr.bf16.mxu0 0
    %462 = vmatpush1.bf16.msra.mxu0 %v243
    %463 = vmatprep.subr.bf16.mxu0 0
    %464 = vmatpush1.bf16.msra.mxu0 %v244
    %465 = vmatprep.subr.bf16.mxu0 0
    %466 = vmatpush1.bf16.msra.mxu0 %v245
    %467 = vmatprep.subr.bf16.mxu0 0
    %468 = vmatpush1.bf16.msra.mxu0 0
    %469 = vmatprep.subr.bf16.mxu0 0
    %470 = vmatpush1.bf16.msra.mxu0 0
    %471 = vmatprep.subr.bf16.mxu0 0
    %472 = vmatpush1.bf16.msra.mxu0 0
    %473 = vmatprep.subr.bf16.mxu0 0
    %474 = vmatpush1.bf16.msra.mxu0 0
    %475 = vmatprep.subr.bf16.mxu0 0
    %476 = vmatpush1.bf16.msra.mxu0 0
    %477 = vmatprep.subr.bf16.mxu0 0
    %478 = vmatpush1.bf16.msra.mxu0 0
    %479 = vmatprep.subr.bf16.mxu0 0
    %480 = vmatpush1.bf16.msra.mxu0 0
    %481 = vmatprep.subr.bf16.mxu0 0
    %482 = vmatpush1.bf16.msra.mxu0 0
    %483 = vmatprep.mubr.bf16.mxu0 0
    %484 = vmatmul.mubr.bf16.gmra.mrb[0].mxu0 %v450
    %v485 = vpop.f32.mrb[0].mxu0
    %v486 = vadd.f32 0.0, %v485
    %v487 = vpop.f32.mrb[0].mxu0
    %v488 = vpop.f32.mrb[0].mxu0
    %v489 = vpop.f32.mrb[0].mxu0
    %490 = vdwg.mxu0
    %v491 = vadd.f32 %v211, %v486
    %v492 = vtanh.pop %v449
    %v493 = vtanh.pop %v491
    %vm494 = vcmp.gt.s32.totalorder %v52, 2
    %v495 = vmax.f32 %v399, %v492
    %v496 = vsel %vm494, 1, 0
    %497 = vset.pattern.permute.xlu0 0
    %498 = vperm.xlu0 %497, %v496
    %v499 = vpop.permute.xlu0 %498
    %vm500 = vcmp.eq.s32.totalorder %v499, 1
    %v501 = vsel %vm500, %v495, %v399
    %vm502 = vcmp.gt.s32.totalorder %v53, 2
    %v503 = vmax.f32 %v407, %v493
    %v504 = vsel %vm502, 1, 0
    %505 = vset.pattern.permute.xlu0 0
    %506 = vperm.xlu0 %505, %v504
    %v507 = vpop.permute.xlu0 %506
    %vm508 = vcmp.eq.s32.totalorder %v507, 1
    %v509 = vsel %vm508, %v503, %v407
    %v510 = vpack.c.bf16 %v492, %v492
    %511 = vmatprep.subr.bf16.mxu0 0
    %512 = vmatpush1.bf16.msra.mxu0 %v238
    %513 = vmatprep.subr.bf16.mxu0 0
    %514 = vmatpush1.bf16.msra.mxu0 %v239
    %515 = vmatprep.subr.bf16.mxu0 0
    %516 = vmatpush1.bf16.msra.mxu0 %v240
    %517 = vmatprep.subr.bf16.mxu0 0
    %518 = vmatpush1.bf16.msra.mxu0 %v241
    %519 = vmatprep.subr.bf16.mxu0 0
    %520 = vmatpush1.bf16.msra.mxu0 %v242
    %521 = vmatprep.subr.bf16.mxu0 0
    %522 = vmatpush1.bf16.msra.mxu0 %v243
    %523 = vmatprep.subr.bf16.mxu0 0
    %524 = vmatpush1.bf16.msra.mxu0 %v244
    %525 = vmatprep.subr.bf16.mxu0 0
    %526 = vmatpush1.bf16.msra.mxu0 %v245
    %527 = vmatprep.subr.bf16.mxu0 0
    %528 = vmatpush1.bf16.msra.mxu0 0
    %529 = vmatprep.subr.bf16.mxu0 0
    %530 = vmatpush1.bf16.msra.mxu0 0
    %531 = vmatprep.subr.bf16.mxu0 0
    %532 = vmatpush1.bf16.msra.mxu0 0
    %533 = vmatprep.subr.bf16.mxu0 0
    %534 = vmatpush1.bf16.msra.mxu0 0
    %535 = vmatprep.subr.bf16.mxu0 0
    %536 = vmatpush1.bf16.msra.mxu0 0
    %537 = vmatprep.subr.bf16.mxu0 0
    %538 = vmatpush1.bf16.msra.mxu0 0
    %539 = vmatprep.subr.bf16.mxu0 0
    %540 = vmatpush1.bf16.msra.mxu0 0
    %541 = vmatprep.subr.bf16.mxu0 0
    %542 = vmatpush1.bf16.msra.mxu0 0
    %543 = vmatprep.mubr.bf16.mxu0 0
    %544 = vmatmul.mubr.bf16.gmra.mrb[0].mxu0 %v510
    %v545 = vpop.f32.mrb[0].mxu0
    %v546 = vadd.f32 0.0, %v545
    %v547 = vpop.f32.mrb[0].mxu0
    %v548 = vpop.f32.mrb[0].mxu0
    %v549 = vpop.f32.mrb[0].mxu0
    %550 = vdwg.mxu0
    %v551 = vadd.f32 %v212, %v546
    %v552 = vpack.c.bf16 %v493, %v493
    %553 = vmatprep.subr.bf16.mxu0 0
    %554 = vmatpush1.bf16.msra.mxu0 %v238
    %555 = vmatprep.subr.bf16.mxu0 0
    %556 = vmatpush1.bf16.msra.mxu0 %v239
    %557 = vmatprep.subr.bf16.mxu0 0
    %558 = vmatpush1.bf16.msra.mxu0 %v240
    %559 = vmatprep.subr.bf16.mxu0 0
    %560 = vmatpush1.bf16.msra.mxu0 %v241
    %561 = vmatprep.subr.bf16.mxu0 0
    %562 = vmatpush1.bf16.msra.mxu0 %v242
    %563 = vmatprep.subr.bf16.mxu0 0
    %564 = vmatpush1.bf16.msra.mxu0 %v243
    %565 = vmatprep.subr.bf16.mxu0 0
    %566 = vmatpush1.bf16.msra.mxu0 %v244
    %567 = vmatprep.subr.bf16.mxu0 0
    %568 = vmatpush1.bf16.msra.mxu0 %v245
    %569 = vmatprep.subr.bf16.mxu0 0
    %570 = vmatpush1.bf16.msra.mxu0 0
    %571 = vmatprep.subr.bf16.mxu0 0
    %572 = vmatpush1.bf16.msra.mxu0 0
    %573 = vmatprep.subr.bf16.mxu0 0
    %574 = vmatpush1.bf16.msra.mxu0 0
    %575 = vmatprep.subr.bf16.mxu0 0
    %576 = vmatpush1.bf16.msra.mxu0 0
    %577 = vmatprep.subr.bf16.mxu0 0
    %578 = vmatpush1.bf16.msra.mxu0 0
    %579 = vmatprep.subr.bf16.mxu0 0
    %580 = vmatpush1.bf16.msra.mxu0 0
    %581 = vmatprep.subr.bf16.mxu0 0
    %582 = vmatpush1.bf16.msra.mxu0 0
    %583 = vmatprep.subr.bf16.mxu0 0
    %584 = vmatpush1.bf16.msra.mxu0 0
    %585 = vmatprep.mubr.bf16.mxu0 0
    %586 = vmatmul.mubr.bf16.gmra.mrb[0].mxu0 %v552
    %v587 = vpop.f32.mrb[0].mxu0
    %v588 = vadd.f32 0.0, %v587
    %v589 = vpop.f32.mrb[0].mxu0
    %v590 = vpop.f32.mrb[0].mxu0
    %v591 = vpop.f32.mrb[0].mxu0
    %592 = vdwg.mxu0
    %v593 = vadd.f32 %v213, %v588
    %v594 = vtanh.pop %v551
    %v595 = vtanh.pop %v593
    %vm596 = vcmp.gt.s32.totalorder %v52, 3
    %v597 = vmax.f32 %v501, %v594
    %v598 = vsel %vm596, 1, 0
    %599 = vset.pattern.permute.xlu0 0
    %600 = vperm.xlu0 %599, %v598
    %v601 = vpop.permute.xlu0 %600
    %vm602 = vcmp.eq.s32.totalorder %v601, 1
    %v603 = vsel %vm602, %v597, %v501
    %vm604 = vcmp.gt.s32.totalorder %v53, 3
    %v605 = vmax.f32 %v509, %v595
    %v606 = vsel %vm604, 1, 0
    %607 = vset.pattern.permute.xlu0 0
    %608 = vperm.xlu0 %607, %v606
    %v609 = vpop.permute.xlu0 %608
    %vm610 = vcmp.eq.s32.totalorder %v609, 1
    %v611 = vsel %vm610, %v605, %v509
    %v612 = vpack.c.bf16 %v594, %v594
    %613 = vmatprep.subr.bf16.mxu0 0
    %614 = vmatpush1.bf16.msra.mxu0 %v238
    %615 = vmatprep.subr.bf16.mxu0 0
    %616 = vmatpush1.bf16.msra.mxu0 %v239
    %617 = vmatprep.subr.bf16.mxu0 0
    %618 = vmatpush1.bf16.msra.mxu0 %v240
    %619 = vmatprep.subr.bf16.mxu0 0
    %620 = vmatpush1.bf16.msra.mxu0 %v241
    %621 = vmatprep.subr.bf16.mxu0 0
    %622 = vmatpush1.bf16.msra.mxu0 %v242
    %623 = vmatprep.subr.bf16.mxu0 0
    %624 = vmatpush1.bf16.msra.mxu0 %v243
    %625 = vmatprep.subr.bf16.mxu0 0
    %626 = vmatpush1.bf16.msra.mxu0 %v244
    %627 = vmatprep.subr.bf16.mxu0 0
    %628 = vmatpush1.bf16.msra.mxu0 %v245
    %629 = vmatprep.subr.bf16.mxu0 0
    %630 = vmatpush1.bf16.msra.mxu0 0
    %631 = vmatprep.subr.bf16.mxu0 0
    %632 = vmatpush1.bf16.msra.mxu0 0
    %633 = vmatprep.subr.bf16.mxu0 0
    %634 = vmatpush1.bf16.msra.mxu0 0
    %635 = vmatprep.subr.bf16.mxu0 0
    %636 = vmatpush1.bf16.msra.mxu0 0
    %637 = vmatprep.subr.bf16.mxu0 0
    %638 = vmatpush1.bf16.msra.mxu0 0
    %639 = vmatprep.subr.bf16.mxu0 0
    %640 = vmatpush1.bf16.msra.mxu0 0
    %641 = vmatprep.subr.bf16.mxu0 0
    %642 = vmatpush1.bf16.msra.mxu0 0
    %643 = vmatprep.subr.bf16.mxu0 0
    %644 = vmatpush1.bf16.msra.mxu0 0
    %645 = vmatprep.mubr.bf16.mxu0 0
    %646 = vmatmul.mubr.bf16.gmra.mrb[0].mxu0 %v612
    %v647 = vpop.f32.mrb[0].mxu0
    %v648 = vadd.f32 0.0, %v647
    %v649 = vpop.f32.mrb[0].mxu0
    %v650 = vpop.f32.mrb[0].mxu0
    %v651 = vpop.f32.mrb[0].mxu0
    %652 = vdwg.mxu0
    %v653 = vadd.f32 %v214, %v648
    %v654 = vpack.c.bf16 %v595, %v595
    %655 = vmatprep.subr.bf16.mxu0 0
    %656 = vmatpush1.bf16.msra.mxu0 %v238
    %657 = vmatprep.subr.bf16.mxu0 0
    %658 = vmatpush1.bf16.msra.mxu0 %v239
    %659 = vmatprep.subr.bf16.mxu0 0
    %660 = vmatpush1.bf16.msra.mxu0 %v240
    %661 = vmatprep.subr.bf16.mxu0 0
    %662 = vmatpush1.bf16.msra.mxu0 %v241
    %663 = vmatprep.subr.bf16.mxu0 0
    %664 = vmatpush1.bf16.msra.mxu0 %v242
    %665 = vmatprep.subr.bf16.mxu0 0
    %666 = vmatpush1.bf16.msra.mxu0 %v243
    %667 = vmatprep.subr.bf16.mxu0 0
    %668 = vmatpush1.bf16.msra.mxu0 %v244
    %669 = vmatprep.subr.bf16.mxu0 0
    %670 = vmatpush1.bf16.msra.mxu0 %v245
    %671 = vmatprep.subr.bf16.mxu0 0
    %672 = vmatpush1.bf16.msra.mxu0 0
    %673 = vmatprep.subr.bf16.mxu0 0
    %674 = vmatpush1.bf16.msra.mxu0 0
    %675 = vmatprep.subr.bf16.mxu0 0
    %676 = vmatpush1.bf16.msra.mxu0 0
    %677 = vmatprep.subr.bf16.mxu0 0
    %678 = vmatpush1.bf16.msra.mxu0 0
    %679 = vmatprep.subr.bf16.mxu0 0
    %680 = vmatpush1.bf16.msra.mxu0 0
    %681 = vmatprep.subr.bf16.mxu0 0
    %682 = vmatpush1.bf16.msra.mxu0 0
    %683 = vmatprep.subr.bf16.mxu0 0
    %684 = vmatpush1.bf16.msra.mxu0 0
    %685 = vmatprep.subr.bf16.mxu0 0
    %686 = vmatpush1.bf16.msra.mxu0 0
    %687 = vmatprep.mubr.bf16.mxu0 0
    %688 = vmatmul.mubr.bf16.gmra.mrb[0].mxu0 %v654
    %v689 = vpop.f32.mrb[0].mxu0
    %v690 = vadd.f32 0.0, %v689
    %v691 = vpop.f32.mrb[0].mxu0
    %v692 = vpop.f32.mrb[0].mxu0
    %v693 = vpop.f32.mrb[0].mxu0
    %694 = vdwg.mxu0
    %v695 = vadd.f32 %v215, %v690
    %v696 = vtanh.pop %v653
    %v697 = vtanh.pop %v695
    %vm698 = vcmp.gt.s32.totalorder %v52, 4
    %v699 = vmax.f32 %v603, %v696
    %v700 = vsel %vm698, 1, 0
    %701 = vset.pattern.permute.xlu0 0
    %702 = vperm.xlu0 %701, %v700
    %v703 = vpop.permute.xlu0 %702
    %vm704 = vcmp.eq.s32.totalorder %v703, 1
    %v705 = vsel %vm704, %v699, %v603
    %vm706 = vcmp.gt.s32.totalorder %v53, 4
    %v707 = vmax.f32 %v611, %v697
    %v708 = vsel %vm706, 1, 0
    %709 = vset.pattern.permute.xlu0 0
    %710 = vperm.xlu0 %709, %v708
    %v711 = vpop.permute.xlu0 %710
    %vm712 = vcmp.eq.s32.totalorder %v711, 1
    %v713 = vsel %vm712, %v707, %v611
    %v714 = vpack.c.bf16 %v696, %v696
    %715 = vmatprep.subr.bf16.mxu0 0
    %716 = vmatpush1.bf16.msra.mxu0 %v238
    %717 = vmatprep.subr.bf16.mxu0 0
    %718 = vmatpush1.bf16.msra.mxu0 %v239
    %719 = vmatprep.subr.bf16.mxu0 0
    %720 = vmatpush1.bf16.msra.mxu0 %v240
    %721 = vmatprep.subr.bf16.mxu0 0
    %722 = vmatpush1.bf16.msra.mxu0 %v241
    %723 = vmatprep.subr.bf16.mxu0 0
    %724 = vmatpush1.bf16.msra.mxu0 %v242
    %725 = vmatprep.subr.bf16.mxu0 0
    %726 = vmatpush1.bf16.msra.mxu0 %v243
    %727 = vmatprep.subr.bf16.mxu0 0
    %728 = vmatpush1.bf16.msra.mxu0 %v244
    %729 = vmatprep.subr.bf16.mxu0 0
    %730 = vmatpush1.bf16.msra.mxu0 %v245
    %731 = vmatprep.subr.bf16.mxu0 0
    %732 = vmatpush1.bf16.msra.mxu0 0
    %733 = vmatprep.subr.bf16.mxu0 0
    %734 = vmatpush1.bf16.msra.mxu0 0
    %735 = vmatprep.subr.bf16.mxu0 0
    %736 = vmatpush1.bf16.msra.mxu0 0
    %737 = vmatprep.subr.bf16.mxu0 0
    %738 = vmatpush1.bf16.msra.mxu0 0
    %739 = vmatprep.subr.bf16.mxu0 0
    %740 = vmatpush1.bf16.msra.mxu0 0
    %741 = vmatprep.subr.bf16.mxu0 0
    %742 = vmatpush1.bf16.msra.mxu0 0
    %743 = vmatprep.subr.bf16.mxu0 0
    %744 = vmatpush1.bf16.msra.mxu0 0
    %745 = vmatprep.subr.bf16.mxu0 0
    %746 = vmatpush1.bf16.msra.mxu0 0
    %747 = vmatprep.mubr.bf16.mxu0 0
    %748 = vmatmul.mubr.bf16.gmra.mrb[0].mxu0 %v714
    %v749 = vpop.f32.mrb[0].mxu0
    %v750 = vadd.f32 0.0, %v749
    %v751 = vpop.f32.mrb[0].mxu0
    %v752 = vpop.f32.mrb[0].mxu0
    %v753 = vpop.f32.mrb[0].mxu0
    %754 = vdwg.mxu0
    %v755 = vadd.f32 %v216, %v750
    %v756 = vpack.c.bf16 %v697, %v697
    %757 = vmatprep.subr.bf16.mxu0 0
    %758 = vmatpush1.bf16.msra.mxu0 %v238
    %759 = vmatprep.subr.bf16.mxu0 0
    %760 = vmatpush1.bf16.msra.mxu0 %v239
    %761 = vmatprep.subr.bf16.mxu0 0
    %762 = vmatpush1.bf16.msra.mxu0 %v240
    %763 = vmatprep.subr.bf16.mxu0 0
    %764 = vmatpush1.bf16.msra.mxu0 %v241
    %765 = vmatprep.subr.bf16.mxu0 0
    %766 = vmatpush1.bf16.msra.mxu0 %v242
    %767 = vmatprep.subr.bf16.mxu0 0
    %768 = vmatpush1.bf16.msra.mxu0 %v243
    %769 = vmatprep.subr.bf16.mxu0 0
    %770 = vmatpush1.bf16.msra.mxu0 %v244
    %771 = vmatprep.subr.bf16.mxu0 0
    %772 = vmatpush1.bf16.msra.mxu0 %v245
    %773 = vmatprep.subr.bf16.mxu0 0
    %774 = vmatpush1.bf16.msra.mxu0 0
    %775 = vmatprep.subr.bf16.mxu0 0
    %776 = vmatpush1.bf16.msra.mxu0 0
    %777 = vmatprep.subr.bf16.mxu0 0
    %778 = vmatpush1.bf16.msra.mxu0 0
    %779 = vmatprep.subr.bf16.mxu0 0
    %780 = vmatpush1.bf16.msra.mxu0 0
    %781 = vmatprep.subr.bf16.mxu0 0
    %782 = vmatpush1.bf16.msra.mxu0 0
    %783 = vmatprep.subr.bf16.mxu0 0
    %784 = vmatpush1.bf16.msra.mxu0 0
    %785 = vmatprep.subr.bf16.mxu0 0
    %786 = vmatpush1.bf16.msra.mxu0 0
    %787 = vmatprep.subr.bf16.mxu0 0
    %788 = vmatpush1.bf16.msra.mxu0 0
    %789 = vmatprep.mubr.bf16.mxu0 0
    %790 = vmatmul.mubr.bf16.gmra.mrb[0].mxu0 %v756
    %v791 = vpop.f32.mrb[0].mxu0
    %v792 = vadd.f32 0.0, %v791
    %v793 = vpop.f32.mrb[0].mxu0
    %v794 = vpop.f32.mrb[0].mxu0
    %v795 = vpop.f32.mrb[0].mxu0
    %796 = vdwg.mxu0
    %v797 = vadd.f32 %v217, %v792
    %v798 = vtanh.pop %v755
    %v799 = vtanh.pop %v797
    %vm800 = vcmp.gt.s32.totalorder %v52, 5
    %v801 = vmax.f32 %v705, %v798
    %v802 = vsel %vm800, 1, 0
    %803 = vset.pattern.permute.xlu0 0
    %804 = vperm.xlu0 %803, %v802
    %v805 = vpop.permute.xlu0 %804
    %vm806 = vcmp.eq.s32.totalorder %v805, 1
    %v807 = vsel %vm806, %v801, %v705
    %vm808 = vcmp.gt.s32.totalorder %v53, 5
    %v809 = vmax.f32 %v713, %v799
    %v810 = vsel %vm808, 1, 0
    %811 = vset.pattern.permute.xlu0 0
    %812 = vperm.xlu0 %811, %v810
    %v813 = vpop.permute.xlu0 %812
    %vm814 = vcmp.eq.s32.totalorder %v813, 1
    %v815 = vsel %vm814, %v809, %v713
    %v816 = vpack.c.bf16 %v798, %v798
    %817 = vmatprep.subr.bf16.mxu0 0
    %818 = vmatpush1.bf16.msra.mxu0 %v238
    %819 = vmatprep.subr.bf16.mxu0 0
    %820 = vmatpush1.bf16.msra.mxu0 %v239
    %821 = vmatprep.subr.bf16.mxu0 0
    %822 = vmatpush1.bf16.msra.mxu0 %v240
    %823 = vmatprep.subr.bf16.mxu0 0
    %824 = vmatpush1.bf16.msra.mxu0 %v241
    %825 = vmatprep.subr.bf16.mxu0 0
    %826 = vmatpush1.bf16.msra.mxu0 %v242
    %827 = vmatprep.subr.bf16.mxu0 0
    %828 = vmatpush1.bf16.msra.mxu0 %v243
    %829 = vmatprep.subr.bf16.mxu0 0
    %830 = vmatpush1.bf16.msra.mxu0 %v244
    %831 = vmatprep.subr.bf16.mxu0 0
    %832 = vmatpush1.bf16.msra.mxu0 %v245
    %833 = vmatprep.subr.bf16.mxu0 0
    %834 = vmatpush1.bf16.msra.mxu0 0
    %835 = vmatprep.subr.bf16.mxu0 0
    %836 = vmatpush1.bf16.msra.mxu0 0
    %837 = vmatprep.subr.bf16.mxu0 0
    %838 = vmatpush1.bf16.msra.mxu0 0
    %839 = vmatprep.subr.bf16.mxu0 0
    %840 = vmatpush1.bf16.msra.mxu0 0
    %841 = vmatprep.subr.bf16.mxu0 0
    %842 = vmatpush1.bf16.msra.mxu0 0
    %843 = vmatprep.subr.bf16.mxu0 0
    %844 = vmatpush1.bf16.msra.mxu0 0
    %845 = vmatprep.subr.bf16.mxu0 0
    %846 = vmatpush1.bf16.msra.mxu0 0
    %847 = vmatprep.subr.bf16.mxu0 0
    %848 = vmatpush1.bf16.msra.mxu0 0
    %849 = vmatprep.mubr.bf16.mxu0 0
    %850 = vmatmul.mubr.bf16.gmra.mrb[0].mxu0 %v816
    %v851 = vpop.f32.mrb[0].mxu0
    %v852 = vadd.f32 0.0, %v851
    %v853 = vpop.f32.mrb[0].mxu0
    %v854 = vpop.f32.mrb[0].mxu0
    %v855 = vpop.f32.mrb[0].mxu0
    %856 = vdwg.mxu0
    %v857 = vadd.f32 %v218, %v852
    %v858 = vpack.c.bf16 %v799, %v799
    %859 = vmatprep.subr.bf16.mxu0 0
    %860 = vmatpush1.bf16.msra.mxu0 %v238
    %861 = vmatprep.subr.bf16.mxu0 0
    %862 = vmatpush1.bf16.msra.mxu0 %v239
    %863 = vmatprep.subr.bf16.mxu0 0
    %864 = vmatpush1.bf16.msra.mxu0 %v240
    %865 = vmatprep.subr.bf16.mxu0 0
    %866 = vmatpush1.bf16.msra.mxu0 %v241
    %867 = vmatprep.subr.bf16.mxu0 0
    %868 = vmatpush1.bf16.msra.mxu0 %v242
    %869 = vmatprep.subr.bf16.mxu0 0
    %870 = vmatpush1.bf16.msra.mxu0 %v243
    %871 = vmatprep.subr.bf16.mxu0 0
    %872 = vmatpush1.bf16.msra.mxu0 %v244
    %873 = vmatprep.subr.bf16.mxu0 0
    %874 = vmatpush1.bf16.msra.mxu0 %v245
    %875 = vmatprep.subr.bf16.mxu0 0
    %876 = vmatpush1.bf16.msra.mxu0 0
    %877 = vmatprep.subr.bf16.mxu0 0
    %878 = vmatpush1.bf16.msra.mxu0 0
    %879 = vmatprep.subr.bf16.mxu0 0
    %880 = vmatpush1.bf16.msra.mxu0 0
    %881 = vmatprep.subr.bf16.mxu0 0
    %882 = vmatpush1.bf16.msra.mxu0 0
    %883 = vmatprep.subr.bf16.mxu0 0
    %884 = vmatpush1.bf16.msra.mxu0 0
    %885 = vmatprep.subr.bf16.mxu0 0
    %886 = vmatpush1.bf16.msra.mxu0 0
    %887 = vmatprep.subr.bf16.mxu0 0
    %888 = vmatpush1.bf16.msra.mxu0 0
    %889 = vmatprep.subr.bf16.mxu0 0
    %890 = vmatpush1.bf16.msra.mxu0 0
    %891 = vmatprep.mubr.bf16.mxu0 0
    %892 = vmatmul.mubr.bf16.gmra.mrb[0].mxu0 %v858
    %v893 = vpop.f32.mrb[0].mxu0
    %v894 = vadd.f32 0.0, %v893
    %v895 = vpop.f32.mrb[0].mxu0
    %v896 = vpop.f32.mrb[0].mxu0
    %v897 = vpop.f32.mrb[0].mxu0
    %898 = vdwg.mxu0
    %v899 = vadd.f32 %v219, %v894
    %v900 = vtanh.pop %v857
    %v901 = vtanh.pop %v899
    %vm902 = vcmp.gt.s32.totalorder %v52, 6
    %v903 = vmax.f32 %v807, %v900
    %v904 = vsel %vm902, 1, 0
    %905 = vset.pattern.permute.xlu0 0
    %906 = vperm.xlu0 %905, %v904
    %v907 = vpop.permute.xlu0 %906
    %vm908 = vcmp.eq.s32.totalorder %v907, 1
    %v909 = vsel %vm908, %v903, %v807
    %vm910 = vcmp.gt.s32.totalorder %v53, 6
    %v911 = vmax.f32 %v815, %v901
    %v912 = vsel %vm910, 1, 0
    %913 = vset.pattern.permute.xlu0 0
    %914 = vperm.xlu0 %913, %v912
    %v915 = vpop.permute.xlu0 %914
    %vm916 = vcmp.eq.s32.totalorder %v915, 1
    %v917 = vsel %vm916, %v911, %v815
    %v918 = vpack.c.bf16 %v900, %v900
    %919 = vmatprep.subr.bf16.mxu0 0
    %920 = vmatpush1.bf16.msra.mxu0 %v238
    %921 = vmatprep.subr.bf16.mxu0 0
    %922 = vmatpush1.bf16.msra.mxu0 %v239
    %923 = vmatprep.subr.bf16.mxu0 0
    %924 = vmatpush1.bf16.msra.mxu0 %v240
    %925 = vmatprep.subr.bf16.mxu0 0
    %926 = vmatpush1.bf16.msra.mxu0 %v241
    %927 = vmatprep.subr.bf16.mxu0 0
    %928 = vmatpush1.bf16.msra.mxu0 %v242
    %929 = vmatprep.subr.bf16.mxu0 0
    %930 = vmatpush1.bf16.msra.mxu0 %v243
    %931 = vmatprep.subr.bf16.mxu0 0
    %932 = vmatpush1.bf16.msra.mxu0 %v244
    %933 = vmatprep.subr.bf16.mxu0 0
    %934 = vmatpush1.bf16.msra.mxu0 %v245
    %935 = vmatprep.subr.bf16.mxu0 0
    %936 = vmatpush1.bf16.msra.mxu0 0
    %937 = vmatprep.subr.bf16.mxu0 0
    %938 = vmatpush1.bf16.msra.mxu0 0
    %939 = vmatprep.subr.bf16.mxu0 0
    %940 = vmatpush1.bf16.msra.mxu0 0
    %941 = vmatprep.subr.bf16.mxu0 0
    %942 = vmatpush1.bf16.msra.mxu0 0
    %943 = vmatprep.subr.bf16.mxu0 0
    %944 = vmatpush1.bf16.msra.mxu0 0
    %945 = vmatprep.subr.bf16.mxu0 0
    %946 = vmatpush1.bf16.msra.mxu0 0
    %947 = vmatprep.subr.bf16.mxu0 0
    %948 = vmatpush1.bf16.msra.mxu0 0
    %949 = vmatprep.subr.bf16.mxu0 0
    %950 = vmatpush1.bf16.msra.mxu0 0
    %951 = vmatprep.mubr.bf16.mxu0 0
    %952 = vmatmul.mubr.bf16.gmra.mrb[0].mxu0 %v918
    %v953 = vpop.f32.mrb[0].mxu0
    %v954 = vadd.f32 0.0, %v953
    %v955 = vpop.f32.mrb[0].mxu0
    %v956 = vpop.f32.mrb[0].mxu0
    %v957 = vpop.f32.mrb[0].mxu0
    %958 = vdwg.mxu0
    %v959 = vadd.f32 %v220, %v954
    %v960 = vpack.c.bf16 %v901, %v901
    %961 = vmatprep.subr.bf16.mxu0 0
    %962 = vmatpush1.bf16.msra.mxu0 %v238
    %963 = vmatprep.subr.bf16.mxu0 0
    %964 = vmatpush1.bf16.msra.mxu0 %v239
    %965 = vmatprep.subr.bf16.mxu0 0
    %966 = vmatpush1.bf16.msra.mxu0 %v240
    %967 = vmatprep.subr.bf16.mxu0 0
    %968 = vmatpush1.bf16.msra.mxu0 %v241
    %969 = vmatprep.subr.bf16.mxu0 0
    %970 = vmatpush1.bf16.msra.mxu0 %v242
    %971 = vmatprep.subr.bf16.mxu0 0
    %972 = vmatpush1.bf16.msra.mxu0 %v243
    %973 = vmatprep.subr.bf16.mxu0 0
    %974 = vmatpush1.bf16.msra.mxu0 %v244
    %975 = vmatprep.subr.bf16.mxu0 0
    %976 = vmatpush1.bf16.msra.mxu0 %v245
    %977 = vmatprep.subr.bf16.mxu0 0
    %978 = vmatpush1.bf16.msra.mxu0 0
    %979 = vmatprep.subr.bf16.mxu0 0
    %980 = vmatpush1.bf16.msra.mxu0 0
    %981 = vmatprep.subr.bf16.mxu0 0
    %982 = vmatpush1.bf16.msra.mxu0 0
    %983 = vmatprep.subr.bf16.mxu0 0
    %984 = vmatpush1.bf16.msra.mxu0 0
    %985 = vmatprep.subr.bf16.mxu0 0
    %986 = vmatpush1.bf16.msra.mxu0 0
    %987 = vmatprep.subr.bf16.mxu0 0
    %988 = vmatpush1.bf16.msra.mxu0 0
    %989 = vmatprep.subr.bf16.mxu0 0
    %990 = vmatpush1.bf16.msra.mxu0 0
    %991 = vmatprep.subr.bf16.mxu0 0
    %992 = vmatpush1.bf16.msra.mxu0 0
    %993 = vmatprep.mubr.bf16.mxu0 0
    %994 = vmatmul.mubr.bf16.gmra.mrb[0].mxu0 %v960
    %v995 = vpop.f32.mrb[0].mxu0
    %v996 = vadd.f32 0.0, %v995
    %v997 = vpop.f32.mrb[0].mxu0
    %v998 = vpop.f32.mrb[0].mxu0
    %v999 = vpop.f32.mrb[0].mxu0
    %1000 = vdwg.mxu0
    %v1001 = vadd.f32 %v221, %v996
    %v1002 = vtanh.pop %v959
    %v1003 = vtanh.pop %v1001
    %vm1004 = vcmp.gt.s32.totalorder %v52, 7
    %v1005 = vmax.f32 %v909, %v1002
    %v1006 = vsel %vm1004, 1, 0
    %1007 = vset.pattern.permute.xlu0 0
    %1008 = vperm.xlu0 %1007, %v1006
    %v1009 = vpop.permute.xlu0 %1008
    %vm1010 = vcmp.eq.s32.totalorder %v1009, 1
    %v1011 = vsel %vm1010, %v1005, %v909
    %vm1012 = vcmp.gt.s32.totalorder %v53, 7
    %v1013 = vmax.f32 %v917, %v1003
    %v1014 = vsel %vm1012, 1, 0
    %1015 = vset.pattern.permute.xlu0 0
    %1016 = vperm.xlu0 %1015, %v1014
    %v1017 = vpop.permute.xlu0 %1016
    %vm1018 = vcmp.eq.s32.totalorder %v1017, 1
    %v1019 = vsel %vm1018, %v1013, %v917
    %v1020 = vpack.c.bf16 %v1019, %v1011
    %v1021 = vld [vmem:[%s5] sm:$0xff]
    %v1022 = vld [vmem:[%s5 + $0x8] sm:$0xff]
    %v1023 = vld [vmem:[%s5 + $0x10] sm:$0xff]
    %v1024 = vld [vmem:[%s5 + $0x18] sm:$0xff]
    %v1025 = vld [vmem:[%s5 + $0x20] sm:$0xff]
    %v1026 = vld [vmem:[%s5 + $0x28] sm:$0xff]
    %v1027 = vld [vmem:[%s5 + $0x30] sm:$0xff]
    %v1028 = vld [vmem:[%s5 + $0x38] sm:$0xff]
    %v1029 = vld [vmem:[%s5 + $0x40] sm:$0xff]
    %v1030 = vld [vmem:[%s5 + $0x48] sm:$0xff]
    %v1031 = vld [vmem:[%s5 + $0x50] sm:$0xff]
    %v1032 = vld [vmem:[%s5 + $0x58] sm:$0xff]
    %v1033 = vld [vmem:[%s5 + $0x60] sm:$0xff]
    %v1034 = vld [vmem:[%s5 + $0x68] sm:$0xff]
    %v1035 = vld [vmem:[%s5 + $0x70] sm:$0xff]
    %v1036 = vld [vmem:[%s5 + $0x78] sm:$0xff]
    %v1037 = vpack.c.bf16 %v1022, %v1021
    %v1038 = vpack.c.bf16 %v1024, %v1023
    %v1039 = vpack.c.bf16 %v1026, %v1025
    %v1040 = vpack.c.bf16 %v1028, %v1027
    %v1041 = vpack.c.bf16 %v1030, %v1029
    %v1042 = vpack.c.bf16 %v1032, %v1031
    %v1043 = vpack.c.bf16 %v1034, %v1033
    %v1044 = vpack.c.bf16 %v1036, %v1035
    %v1045 = vld [vmem:[%s6] sm:$0x1]
    %v1047 = vlaneseq
    %v1048 = vshrl.u32 %v1047, 7
    %v1049 = vsub.s32 0, %v1048
    %v1050 = vrot.slane %v1045, %v1049
    %1052 = vmatprep.subr.bf16.mxu0 0
    %1053 = vmatpush1.bf16.msra.mxu0 %v1037
    %1054 = vmatprep.subr.bf16.mxu0 0
    %1055 = vmatpush1.bf16.msra.mxu0 %v1038
    %1056 = vmatprep.subr.bf16.mxu0 0
    %1057 = vmatpush1.bf16.msra.mxu0 %v1039
    %1058 = vmatprep.subr.bf16.mxu0 0
    %1059 = vmatpush1.bf16.msra.mxu0 %v1040
    %1060 = vmatprep.subr.bf16.mxu0 0
    %1061 = vmatpush1.bf16.msra.mxu0 %v1041
    %1062 = vmatprep.subr.bf16.mxu0 0
    %1063 = vmatpush1.bf16.msra.mxu0 %v1042
    %1064 = vmatprep.subr.bf16.mxu0 0
    %1065 = vmatpush1.bf16.msra.mxu0 %v1043
    %1066 = vmatprep.subr.bf16.mxu0 0
    %1067 = vmatpush1.bf16.msra.mxu0 %v1044
    %1068 = vmatprep.subr.bf16.mxu0 0
    %1069 = vmatpush1.bf16.msra.mxu0 0
    %1070 = vmatprep.subr.bf16.mxu0 0
    %1071 = vmatpush1.bf16.msra.mxu0 0
    %1072 = vmatprep.subr.bf16.mxu0 0
    %1073 = vmatpush1.bf16.msra.mxu0 0
    %1074 = vmatprep.subr.bf16.mxu0 0
    %1075 = vmatpush1.bf16.msra.mxu0 0
    %1076 = vmatprep.subr.bf16.mxu0 0
    %1077 = vmatpush1.bf16.msra.mxu0 0
    %1078 = vmatprep.subr.bf16.mxu0 0
    %1079 = vmatpush1.bf16.msra.mxu0 0
    %1080 = vmatprep.subr.bf16.mxu0 0
    %1081 = vmatpush1.bf16.msra.mxu0 0
    %1082 = vmatprep.subr.bf16.mxu0 0
    %1083 = vmatpush1.bf16.msra.mxu0 0
    %1084 = vmatprep.mubr.bf16.mxu0 0
    %1085 = vmatmul.mubr.bf16.gmra.mrb[0].mxu0 %v1020
    %v1086 = vpop.f32.mrb[0].mxu0
    %v1087 = vadd.f32 %v1050, %v1086
    %v1088 = vpop.f32.mrb[0].mxu0
    %v1089 = vpop.f32.mrb[0].mxu0
    %v1090 = vadd.f32 %v1050, %v1089
    %v1091 = vpop.f32.mrb[0].mxu0
    %1092 = vdwg.mxu0
    %1093 = vst [vmem:[%s10] sm:$0xff] %v1087
    %1094 = vst [vmem:[%s10 + $0x8] sm:$0xff] %v1090
    %v1095 = vld [vmem:[%s7] sm:$0x1]
    %v1097 = vlaneseq
    %v1098 = vshrl.u32 %v1097, 7
    %v1099 = vsub.s32 0, %v1098
    %v1100 = vrot.slane %v1095, %v1099
    %v1102 = vmul.f32 %v1087, %v1100
    %v1103 = vmul.f32 %v1090, %v1100
    %1104 = vadd.xlane.f32.xlu0 %v1102
    %v1105 = vpop.xlane.xlu0 %1104
    %1106 = vadd.xlane.f32.xlu0 %v1103
    %v1107 = vpop.xlane.xlu0 %1106
    %v1108 = vmul.f32 %v1105, 0.5
    %v1109 = vmul.f32 %v1107, 0.5
    %v1110 = vtanh.pop %v1108
    %v1111 = vtanh.pop %v1109
    %v1112 = vadd.f32 %v1110, 1.0
    %v1113 = vadd.f32 %v1111, 1.0
    %v1114 = vmul.f32 %v1112, 0.5
    %v1115 = vmul.f32 %v1113, 0.5
    %s1116 = sld [smem:[#allocation2]]
    %s1117 = sld [smem:[#allocation2 + $0x1]]
    %s1118 = sld [smem:[#allocation2 + $0x2]]
    %v1119 = vld [vmem:[%s8] sm:$0xff]
    %v1120 = vld [vmem:[%s8 + $0x8] sm:$0xff]
    %v1121 = vcvt.s32.f32 %v1119
    %v1122 = vcvt.s32.f32 %v1120
    %vm1123 = vcmp.eq.f32.partialorder %v1121, 1.0
    %vm1124 = vcmp.eq.f32.partialorder %v1122, 1.0
    %v1125 = vsel %vm1123, 1, 0
    %v1126 = vsel %vm1124, 1, 0
    %v1127 = vcvt.s32.f32 %v1125
    %v1128 = vcvt.s32.f32 %v1126
    %v1129 = vsub.f32 1.0, %v1127
    %v1130 = vsub.f32 1.0, %v1128
    %vm1131 = vcmask 7168
    %v1132 = vsel %vm1131, %v1127, 0.0
    %v1133 = vsel %vm1131, %v1128, 0.0
    %v1134 = vadd.f32 %v1132, %v1133
    %1135 = vadd.xlane.f32.xlu0 %v1134
    %v1136 = vpop.xlane.xlu0 %1135
    %v1137 = vrot.slane %v1136, 4
    %v1138 = vadd.f32 %v1136, %v1137
    %v1139 = vrot.slane %v1138, 2
    %v1140 = vadd.f32 %v1138, %v1139
    %v1141 = vrot.slane %v1140, 1
    %v1142 = vadd.f32 %v1140, %v1141
    %s1143 = vtos %v1142
    %v1144 = vrcp.pop 16.0
    %s1145 = vtos %v1144
    %s1146 = smul.f32 %s1143, %s1145
    %s1147 = ssub.f32 1.0, %s1146
    %v1148 = vstv %s1116
    %v1149 = vsub.f32 %v1114, %v1148
    %v1150 = vsub.f32 %v1115, %v1148
    %v1151 = vmul.f32 %v1149, %v1149
    %v1152 = vmul.f32 %v1150, %v1150
    %v1153 = vmul.f32 %v1151, %v1127
    %v1154 = vmul.f32 %v1152, %v1128
    %v1155 = vsel %vm1131, %v1153, 0.0
    %v1156 = vsel %vm1131, %v1154, 0.0
    %v1157 = vadd.f32 %v1155, %v1156
    %1158 = vadd.xlane.f32.xlu0 %v1157
    %v1159 = vpop.xlane.xlu0 %1158
    %v1160 = vrot.slane %v1159, 4
    %v1161 = vadd.f32 %v1159, %v1160
    %v1162 = vrot.slane %v1161, 2
    %v1163 = vadd.f32 %v1161, %v1162
    %v1164 = vrot.slane %v1163, 1
    %v1165 = vadd.f32 %v1163, %v1164
    %s1166 = vtos %v1165
    %v1167 = vrcp.pop 16.0
    %s1168 = vtos %v1167
    %s1169 = smul.f32 %s1166, %s1168
    %s1170 = smul.f32 %s1147, %s1169
    %v1171 = vstv %s1117
    %v1172 = vsub.f32 %v1114, %v1171
    %v1173 = vsub.f32 %v1115, %v1171
    %v1174 = vmul.f32 %v1172, %v1172
    %v1175 = vmul.f32 %v1173, %v1173
    %v1176 = vmul.f32 %v1174, %v1129
    %v1177 = vmul.f32 %v1175, %v1130
    %v1178 = vsel %vm1131, %v1176, 0.0
    %v1179 = vsel %vm1131, %v1177, 0.0
    %v1180 = vadd.f32 %v1178, %v1179
    %1181 = vadd.xlane.f32.xlu0 %v1180
    %v1182 = vpop.xlane.xlu0 %1181
    %v1183 = vrot.slane %v1182, 4
    %v1184 = vadd.f32 %v1182, %v1183
    %v1185 = vrot.slane %v1184, 2
    %v1186 = vadd.f32 %v1184, %v1185
    %v1187 = vrot.slane %v1186, 1
    %v1188 = vadd.f32 %v1186, %v1187
    %s1189 = vtos %v1188
    %v1190 = vrcp.pop 16.0
    %s1191 = vtos %v1190
    %s1192 = smul.f32 %s1189, %s1191
    %s1193 = smul.f32 %s1146, %s1192
    %s1194 = sadd.f32 %s1170, %s1193
    %s1195 = smul.f32 %s1118, 2.0
    %s1196 = smul.f32 %s1146, %s1147
    %v1197 = vstv %s1146
    %v1198 = vmul.f32 %v1197, %v1114
    %v1199 = vmul.f32 %v1197, %v1115
    %v1200 = vmul.f32 %v1198, %v1129
    %v1201 = vmul.f32 %v1199, %v1130
    %v1202 = vstv %s1147
    %v1203 = vmul.f32 %v1202, %v1114
    %v1204 = vmul.f32 %v1202, %v1115
    %v1205 = vmul.f32 %v1203, %v1127
    %v1206 = vmul.f32 %v1204, %v1128
    %v1207 = vsub.f32 %v1200, %v1205
    %v1208 = vsub.f32 %v1201, %v1206
    %v1209 = vsel %vm1131, %v1207, 0.0
    %v1210 = vsel %vm1131, %v1208, 0.0
    %v1211 = vadd.f32 %v1209, %v1210
    %1212 = vadd.xlane.f32.xlu0 %v1211
    %v1213 = vpop.xlane.xlu0 %1212
    %v1214 = vrot.slane %v1213, 4
    %v1215 = vadd.f32 %v1213, %v1214
    %v1216 = vrot.slane %v1215, 2
    %v1217 = vadd.f32 %v1215, %v1216
    %v1218 = vrot.slane %v1217, 1
    %v1219 = vadd.f32 %v1217, %v1218
    %s1220 = vtos %v1219
    %v1221 = vrcp.pop 16.0
    %s1222 = vtos %v1221
    %s1223 = smul.f32 %s1220, %s1222
    %s1224 = sadd.f32 %s1196, %s1223
    %s1225 = smul.f32 %s1195, %s1224
    %s1226 = sadd.f32 %s1194, %s1225
    %s1227 = smul.f32 %s1118, %s1118
    %s1228 = smul.f32 %s1196, %s1227
    %s1229 = ssub.f32 %s1226, %s1228
    %v1230 = vstv %s1229
    %vm1231 = vcmask 0
    %1232 = vst.msk [vmem:[#allocation5] sm:$0x1] %vm1231, %v1230
    // Predicated region
    $region46: #{rnn_aucm_forward.1} parent=1 // pred_check
      _
    $region47: #{rnn_aucm_forward.1} parent=1 // pred_check_branch
      %1234 = sbr.rel (0) target = $region49
    $region48: #{rnn_aucm_forward.1} parent=1 // pred_region
      _
    $region49: #{rnn_aucm_forward.1} parent=1 // pred_fallthru
      _
    // Predicated region
    $region50: #{rnn_aucm_forward.1} parent=1 // pred_check
      _
    $region51: #{rnn_aucm_forward.1} parent=1 // pred_check_branch
      %1236 = sbr.rel (0) target = $region53
    $region52: #{rnn_aucm_forward.1} parent=1 // pred_region
      %s1238 = ssub.s32 16, 16
      %1239 = vsyncadd [#allocation3], %s1238
      %s1241 = sshll.u32 [#allocation5], 4
      %s1242 = int_to_ptr.vmem [resolvable:$true] %s1241
      %1244 = dma.vmem_to_hbm [thread:$0]  %s1242, 16, %s11, [#allocation3]
    $region53: #{rnn_aucm_forward.1} parent=1 // pred_fallthru
      _
    // Predicated region
    $region54: #{rnn_aucm_forward.1} parent=1 // pred_check
      _
    $region55: #{rnn_aucm_forward.1} parent=1 // pred_check_branch
      %1246 = sbr.rel (0) target = $region57
    $region56: #{rnn_aucm_forward.1} parent=1 // pred_region
      _
    $region57: #{rnn_aucm_forward.1} parent=1 // pred_fallthru
      _
    // Predicated region
    $region58: #{rnn_aucm_forward.1} parent=1 // pred_check
      _
    $region59: #{rnn_aucm_forward.1} parent=1 // pred_check_branch
      %1248 = sbr.rel (0) target = $region61
    $region60: #{rnn_aucm_forward.1} parent=1 // pred_region
      %1249 = dma.done [#allocation3], 16
    $region61: #{rnn_aucm_forward.1} parent=1 // pred_fallthru
      _
    %1250 = vsyncpa [#allocation3], 1
    %1251 = vsyncpa [#allocation4], 1

</llo_original>
